<compile_context>
chip_gen: v6e
topology: v6e:2x2x1
jax: 0.10.0
libtpu: 0.0.40
codegen_flags: <defaults>
</compile_context>

<pallas_src>
import functools

import jax
import jax.numpy as jnp
import numpy as np
from jax.experimental import pallas as pl
from jax.experimental.pallas import tpu as pltpu


def _bilerp_kernel(tab_ref, r_ref, z_ref, out_ref, *, rgrid0, zgrid0, nr, nz, h):
    """Fused gather + bilinear interpolation for one tile of points.

    tab_ref : (nr, nz) f32 travel-time table (order='C'), VMEM resident.
    r_ref   : (1, P)  f32 query r coordinates (P lane-dense points).
    z_ref   : (1, P)  f32 query z coordinates.
    out_ref : (1, P)  f32 interpolated travel times.
    """
    f32 = jnp.float32
    r = r_ref[...]
    z = z_ref[...]
    tab = tab_ref[...]

    inv_h = f32(1.0 / h)
    hh = f32(h)

    # Cell indices, clipped exactly like the reference (_interp).
    ir0 = jnp.clip(jnp.floor((r - f32(rgrid0)) * inv_h),
                   f32(0.0), f32(nr - 2)).astype(jnp.int32)
    iz0 = jnp.clip(jnp.floor((z - f32(zgrid0)) * inv_h),
                   f32(0.0), f32(nz - 2)).astype(jnp.int32)

    # Bilinear weights; each already carries a 1/h factor, so no 1/h^2 at the
    # end.  (Weights extrapolate for out-of-grid points, same as the reference.)
    x1 = ir0.astype(f32) * hh + f32(rgrid0)
    y1 = iz0.astype(f32) * hh + f32(zgrid0)
    wx1 = (r - x1) * inv_h                  # weight of row ir0 + 1
    wx2 = (x1 + hh - r) * inv_h             # weight of row ir0
    wy1 = (z - y1) * inv_h                  # weight of col iz0 + 1
    wy2 = (y1 + hh - z) * inv_h             # weight of col iz0

    P = r.shape[1]

    # Weighted one-hot selectors: grid index on sublanes, points on lanes.
    row_ids = jax.lax.broadcasted_iota(jnp.int32, (nr, P), 0)
    wr = (jnp.where(row_ids == ir0, wx2, f32(0.0)) +
          jnp.where(row_ids == ir0 + 1, wx1, f32(0.0)))       # (nr, P)

    col_ids = jax.lax.broadcasted_iota(jnp.int32, (nz, P), 0)
    wc = (jnp.where(col_ids == iz0, wy2, f32(0.0)) +
          jnp.where(col_ids == iz0 + 1, wy1, f32(0.0)))       # (nz, P)

    # z-interpolation as an MXU matmul (selects + blends the two columns per
    # point), then r-interpolation as a VPU multiply + sublane reduce.
    v = jnp.dot(tab, wc, preferred_element_type=jnp.float32)   # (nr, P)
    out_ref[...] = jnp.sum(wr * v, axis=0, keepdims=True)      # (1, P)


def test_forward(r, z, timetable, rgrid0, zgrid0, nr, nz, h, *, tile_n=8192):
    """Pallas forward for the `Test` module: bilinear interp of `timetable`."""
    N = int(r.shape[0])
    nr = int(nr)
    nz = int(nz)
    r = jnp.asarray(r, jnp.float32)
    z = jnp.asarray(z, jnp.float32)
    tab = jnp.asarray(timetable, jnp.float32).reshape(nr, nz)   # order='C'

    # --- tile selection -----------------------------------------------------
    np0 = pl.cdiv(N, 128) * 128
    # Cap the tile so the (nr, tile) / (nz, tile) f32 intermediates stay well
    # inside VMEM on every generation (incl. v7x's smaller physical VMEM).
    vmem_budget = 6 * 1024 * 1024
    max_tile = max(128, (vmem_budget // (4 * (2 * nr + 2 * nz))) // 128 * 128)
    tile = max(128, (min(int(tile_n), max_tile, np0) // 128) * 128)
    # Prefer >= 2 grid steps so v7x can shard the parallel axis over both TCs.
    if tile >= np0 and np0 >= 256:
        tile = pl.cdiv(pl.cdiv(np0, 2), 128) * 128
    n_tiles = pl.cdiv(np0, tile)
    Np = n_tiles * tile

    r_p = jnp.pad(r, (0, Np - N)).reshape(1, Np)
    z_p = jnp.pad(z, (0, Np - N)).reshape(1, Np)

    kernel = functools.partial(_bilerp_kernel, rgrid0=float(rgrid0),
                               zgrid0=float(zgrid0), nr=nr, nz=nz, h=float(h))

    cost = pl.CostEstimate(
        flops=int(Np) * (2 * nr * nz + 8 * (nr + nz) + 3 * nr + 32),
        transcendentals=0,
        bytes_accessed=int(Np) * 12 + nr * nz * 4)

    out = pl.pallas_call(
        kernel,
        out_shape=jax.ShapeDtypeStruct((1, Np), jnp.float32),
        grid=(n_tiles,),
        in_specs=[
            pl.BlockSpec((nr, nz), lambda i: (0, 0)),     # whole table, VMEM
            pl.BlockSpec((1, tile), lambda i: (0, i)),    # r
            pl.BlockSpec((1, tile), lambda i: (0, i)),    # z
        ],
        out_specs=pl.BlockSpec((1, tile), lambda i: (0, i)),
        compiler_params=pltpu.CompilerParams(
            dimension_semantics=("parallel",),
            vmem_limit_bytes=32 * 1024 * 1024),
        cost_estimate=cost,
    )(tab, r_p, z_p)

    return out[0, :N]


class TestPallas:
    """Mirror of the PyTorch `Test` module (forward only)."""

    def __init__(self, timetable, rgrid0, zgrid0, nr, nz, h):
        self.timetable = timetable
        self.rgrid0 = rgrid0
        self.zgrid0 = zgrid0
        self.nr = nr
        self.nz = nz
        self.h = h

    def forward(self, r, z, *, tile_n=8192):
        return test_forward(r, z, self.timetable, self.rgrid0, self.zgrid0,
                            self.nr, self.nz, self.h, tile_n=tile_n)


def test_reference(r, z, timetable, rgrid0, zgrid0, nr, nz, h):
    """Pure-JAX reference mirroring _interp (order='C')."""
    r = r.astype(jnp.float32)
    z = z.astype(jnp.float32)
    timetable = timetable.astype(jnp.float32)
    ir0 = jnp.clip(jnp.floor((r - rgrid0) / h), 0, nr - 2).astype(jnp.int32)
    iz0 = jnp.clip(jnp.floor((z - zgrid0) / h), 0, nz - 2).astype(jnp.int32)
    ir1 = ir0 + 1
    iz1 = iz0 + 1
    x1 = ir0 * h + rgrid0
    x2 = ir1 * h + rgrid0
    y1 = iz0 * h + zgrid0
    y2 = iz1 * h + zgrid0
    Q11 = timetable[ir0 * nz + iz0]
    Q12 = timetable[ir0 * nz + iz1]
    Q21 = timetable[ir1 * nz + iz0]
    Q22 = timetable[ir1 * nz + iz1]
    t = (1.0 / (x2 - x1) / (y2 - y1) *
         (Q11 * (x2 - r) * (y2 - z) + Q21 * (r - x1) * (y2 - z) +
          Q12 * (x2 - r) * (z - y1) + Q22 * (r - x1) * (z - y1)))
    return t


if __name__ == "__main__":
    # Small, deterministic synthetic problem.
    nr, nz = 32, 32
    h = 0.5
    rgrid0, zgrid0 = 0.0, -2.0
    num_points = 5000           # not a multiple of 128 -> exercises padding

    # Smooth travel-time table (homogeneous-velocity distance/v), flattened in
    # C order exactly as the PyTorch module expects.
    rr = rgrid0 + h * jnp.arange(nr, dtype=jnp.float32)
    zz = zgrid0 + h * jnp.arange(nz, dtype=jnp.float32)
    RR, ZZ = jnp.meshgrid(rr, zz, indexing="ij")                  # (nr, nz)
    timetable = (jnp.sqrt(RR * RR + ZZ * ZZ) / 6.0).reshape(-1)   # (nr*nz,)

    key = jax.random.PRNGKey(0)
    k1, k2 = jax.random.split(key, 2)
    r_min, r_max = rgrid0, rgrid0 + (nr - 1) * h
    z_min, z_max = zgrid0, zgrid0 + (nz - 1) * h
    # Sample slightly beyond the grid to exercise the clipping/extrapolation path.
    r_pts = jax.random.uniform(k1, (num_points,), jnp.float32,
                               r_min - 0.5 * h, r_max + 0.5 * h)
    z_pts = jax.random.uniform(k2, (num_points,), jnp.float32,
                               z_min - 0.5 * h, z_max + 0.5 * h)

    model = TestPallas(timetable, rgrid0, zgrid0, nr, nz, h)
    tt = model.forward(r_pts, z_pts)           # -> 2 lane-dense tiles
    jax.block_until_ready(tt)

    tt_ref = test_reference(r_pts, z_pts, timetable, rgrid0, zgrid0, nr, nz, h)
    np.testing.assert_allclose(np.asarray(tt), np.asarray(tt_ref),
                               rtol=5e-4, atol=5e-4)

    print("KERNEL_OK")
</pallas_src>

<mosaic_0001>
module attributes {stable_mosaic.version = 11 : i64} {
  func.func @_bilerp_kernel(%arg0: i32, %arg1: memref<32x32xf32, #tpu.memory_space<vmem>>, %arg2: memref<1x2560xf32, #tpu.memory_space<vmem>>, %arg3: memref<1x2560xf32, #tpu.memory_space<vmem>>, %arg4: memref<1x2560xf32, #tpu.memory_space<vmem>>) attributes {dimension_semantics = [#tpu.dimension_semantics<parallel>], iteration_bounds = array<i64: 2>, scalar_prefetch = 0 : i64, scratch_operands = 0 : i64, tpu.core_type = #tpu.core_type<tc>, window_params = [{pipeline_mode = #tpu.pipeline_mode<synchronous>, transform_indices = @transform_0, window_bounds = array<i64: 32, 32>}, {transform_indices = @transform_1, window_bounds = array<i64: 1, 2560>}, {transform_indices = @transform_2, window_bounds = array<i64: 1, 2560>}, {transform_indices = @transform_3, window_bounds = array<i64: 1, 2560>}]} {
    %c0 = arith.constant 0 : index
    %c0_0 = arith.constant 0 : index
    %0 = vector.load %arg2[%c0, %c0_0] : memref<1x2560xf32, #tpu.memory_space<vmem>>, vector<1x2560xf32>
    %c0_1 = arith.constant 0 : index
    %c0_2 = arith.constant 0 : index
    %1 = vector.load %arg3[%c0_1, %c0_2] : memref<1x2560xf32, #tpu.memory_space<vmem>>, vector<1x2560xf32>
    %c0_3 = arith.constant 0 : index
    %c0_4 = arith.constant 0 : index
    %2 = vector.load %arg1[%c0_3, %c0_4] : memref<32x32xf32, #tpu.memory_space<vmem>>, vector<32x32xf32>
    %cst = arith.constant 0.000000e+00 : f32
    %3 = vector.broadcast %cst : f32 to vector<1x2560xf32>
    %4 = arith.subf %0, %3 : vector<1x2560xf32>
    %cst_5 = arith.constant 2.000000e+00 : f32
    %5 = vector.broadcast %cst_5 : f32 to vector<1x2560xf32>
    %6 = arith.mulf %4, %5 : vector<1x2560xf32>
    %7 = math.floor %6 : vector<1x2560xf32>
    %cst_6 = arith.constant 0.000000e+00 : f32
    %cst_7 = arith.constant 3.000000e+01 : f32
    %8 = vector.broadcast %cst_6 : f32 to vector<1x2560xf32>
    %9 = arith.maximumf %8, %7 : vector<1x2560xf32>
    %10 = vector.broadcast %cst_7 : f32 to vector<1x2560xf32>
    %11 = arith.minimumf %10, %9 : vector<1x2560xf32>
    %12 = arith.fptosi %11 : vector<1x2560xf32> to vector<1x2560xi32>
    %cst_8 = arith.constant -2.000000e+00 : f32
    %13 = vector.broadcast %cst_8 : f32 to vector<1x2560xf32>
    %14 = arith.subf %1, %13 : vector<1x2560xf32>
    %cst_9 = arith.constant 2.000000e+00 : f32
    %15 = vector.broadcast %cst_9 : f32 to vector<1x2560xf32>
    %16 = arith.mulf %14, %15 : vector<1x2560xf32>
    %17 = math.floor %16 : vector<1x2560xf32>
    %cst_10 = arith.constant 0.000000e+00 : f32
    %cst_11 = arith.constant 3.000000e+01 : f32
    %18 = vector.broadcast %cst_10 : f32 to vector<1x2560xf32>
    %19 = arith.maximumf %18, %17 : vector<1x2560xf32>
    %20 = vector.broadcast %cst_11 : f32 to vector<1x2560xf32>
    %21 = arith.minimumf %20, %19 : vector<1x2560xf32>
    %22 = arith.fptosi %21 : vector<1x2560xf32> to vector<1x2560xi32>
    %23 = arith.sitofp %12 : vector<1x2560xi32> to vector<1x2560xf32>
    %cst_12 = arith.constant 5.000000e-01 : f32
    %24 = vector.broadcast %cst_12 : f32 to vector<1x2560xf32>
    %25 = arith.mulf %23, %24 : vector<1x2560xf32>
    %cst_13 = arith.constant 0.000000e+00 : f32
    %26 = vector.broadcast %cst_13 : f32 to vector<1x2560xf32>
    %27 = arith.addf %25, %26 : vector<1x2560xf32>
    %28 = arith.sitofp %22 : vector<1x2560xi32> to vector<1x2560xf32>
    %cst_14 = arith.constant 5.000000e-01 : f32
    %29 = vector.broadcast %cst_14 : f32 to vector<1x2560xf32>
    %30 = arith.mulf %28, %29 : vector<1x2560xf32>
    %cst_15 = arith.constant -2.000000e+00 : f32
    %31 = vector.broadcast %cst_15 : f32 to vector<1x2560xf32>
    %32 = arith.addf %30, %31 : vector<1x2560xf32>
    %33 = arith.subf %0, %27 : vector<1x2560xf32>
    %cst_16 = arith.constant 2.000000e+00 : f32
    %34 = vector.broadcast %cst_16 : f32 to vector<1x2560xf32>
    %35 = arith.mulf %33, %34 : vector<1x2560xf32>
    %cst_17 = arith.constant 5.000000e-01 : f32
    %36 = vector.broadcast %cst_17 : f32 to vector<1x2560xf32>
    %37 = arith.addf %27, %36 : vector<1x2560xf32>
    %38 = arith.subf %37, %0 : vector<1x2560xf32>
    %cst_18 = arith.constant 2.000000e+00 : f32
    %39 = vector.broadcast %cst_18 : f32 to vector<1x2560xf32>
    %40 = arith.mulf %38, %39 : vector<1x2560xf32>
    %41 = arith.subf %1, %32 : vector<1x2560xf32>
    %cst_19 = arith.constant 2.000000e+00 : f32
    %42 = vector.broadcast %cst_19 : f32 to vector<1x2560xf32>
    %43 = arith.mulf %41, %42 : vector<1x2560xf32>
    %cst_20 = arith.constant 5.000000e-01 : f32
    %44 = vector.broadcast %cst_20 : f32 to vector<1x2560xf32>
    %45 = arith.addf %32, %44 : vector<1x2560xf32>
    %46 = arith.subf %45, %1 : vector<1x2560xf32>
    %cst_21 = arith.constant 2.000000e+00 : f32
    %47 = vector.broadcast %cst_21 : f32 to vector<1x2560xf32>
    %48 = arith.mulf %46, %47 : vector<1x2560xf32>
    %49 = tpu.iota {dimensions = array<i32: 0>} : vector<32x2560xi32>
    %50 = vector.broadcast %12 : vector<1x2560xi32> to vector<32x2560xi32>
    %51 = arith.cmpi eq, %49, %50 : vector<32x2560xi32>
    %cst_22 = arith.constant 0.000000e+00 : f32
    %52 = vector.shape_cast %40 : vector<1x2560xf32> to vector<1x2560xf32>
    %53 = vector.broadcast %52 : vector<1x2560xf32> to vector<32x2560xf32>
    %54 = vector.broadcast %cst_22 : f32 to vector<32x2560xf32>
    %55 = arith.select %51, %53, %54 : vector<32x2560xi1>, vector<32x2560xf32>
    %c1_i32 = arith.constant 1 : i32
    %56 = vector.broadcast %c1_i32 : i32 to vector<1x2560xi32>
    %57 = arith.addi %12, %56 : vector<1x2560xi32>
    %58 = vector.broadcast %57 : vector<1x2560xi32> to vector<32x2560xi32>
    %59 = arith.cmpi eq, %49, %58 : vector<32x2560xi32>
    %cst_23 = arith.constant 0.000000e+00 : f32
    %60 = vector.shape_cast %35 : vector<1x2560xf32> to vector<1x2560xf32>
    %61 = vector.broadcast %60 : vector<1x2560xf32> to vector<32x2560xf32>
    %62 = vector.broadcast %cst_23 : f32 to vector<32x2560xf32>
    %63 = arith.select %59, %61, %62 : vector<32x2560xi1>, vector<32x2560xf32>
    %64 = arith.addf %55, %63 : vector<32x2560xf32>
    %65 = tpu.iota {dimensions = array<i32: 0>} : vector<32x2560xi32>
    %66 = vector.broadcast %22 : vector<1x2560xi32> to vector<32x2560xi32>
    %67 = arith.cmpi eq, %65, %66 : vector<32x2560xi32>
    %cst_24 = arith.constant 0.000000e+00 : f32
    %68 = vector.shape_cast %48 : vector<1x2560xf32> to vector<1x2560xf32>
    %69 = vector.broadcast %68 : vector<1x2560xf32> to vector<32x2560xf32>
    %70 = vector.broadcast %cst_24 : f32 to vector<32x2560xf32>
    %71 = arith.select %67, %69, %70 : vector<32x2560xi1>, vector<32x2560xf32>
    %c1_i32_25 = arith.constant 1 : i32
    %72 = vector.broadcast %c1_i32_25 : i32 to vector<1x2560xi32>
    %73 = arith.addi %22, %72 : vector<1x2560xi32>
    %74 = vector.broadcast %73 : vector<1x2560xi32> to vector<32x2560xi32>
    %75 = arith.cmpi eq, %65, %74 : vector<32x2560xi32>
    %cst_26 = arith.constant 0.000000e+00 : f32
    %76 = vector.shape_cast %43 : vector<1x2560xf32> to vector<1x2560xf32>
    %77 = vector.broadcast %76 : vector<1x2560xf32> to vector<32x2560xf32>
    %78 = vector.broadcast %cst_26 : f32 to vector<32x2560xf32>
    %79 = arith.select %75, %77, %78 : vector<32x2560xi1>, vector<32x2560xf32>
    %80 = arith.addf %71, %79 : vector<32x2560xf32>
    %cst_27 = arith.constant dense<0.000000e+00> : vector<32x2560xf32>
    %81 = tpu.matmul %2, %80, %cst_27 {dimension_numbers = #tpu.dot_dimension_numbers<[1], [0], [0], [1], [0, 0, 1, 1], [], []>} : vector<32x32xf32>, vector<32x2560xf32>, vector<32x2560xf32> -> vector<32x2560xf32>
    %82 = arith.mulf %64, %81 : vector<32x2560xf32>
    %cst_28 = arith.constant dense<0.000000e+00> : vector<2560xf32>
    %83 = vector.multi_reduction <add>, %82, %cst_28 [0] : vector<32x2560xf32> to vector<2560xf32>
    %84 = vector.shape_cast %83 : vector<2560xf32> to vector<1x2560xf32>
    %c0_29 = arith.constant 0 : index
    %c0_30 = arith.constant 0 : index
    %85 = vector.load %arg4[%c0_29, %c0_30] : memref<1x2560xf32, #tpu.memory_space<vmem>>, vector<1x2560xf32>
    tpu.vector_store %arg4[%c0_29, %c0_30], %84 {strides = array<i32>} : memref<1x2560xf32, #tpu.memory_space<vmem>>, vector<1x2560xf32>,
    return
  }
  func.func @transform_0(%arg0: i32) -> (i32, i32) {
    %c0_i32 = arith.constant 0 : i32
    %c0_i32_0 = arith.constant 0 : i32
    %c0_i32_1 = arith.constant 0 : i32
    return %c0_i32, %c0_i32_0 : i32, i32
  }
  func.func @transform_1(%arg0: i32) -> (i32, i32) {
    %c0_i32 = arith.constant 0 : i32
    %c0_i32_0 = arith.constant 0 : i32
    return %c0_i32, %arg0 : i32, i32
  }
  func.func @transform_2(%arg0: i32) -> (i32, i32) {
    %c0_i32 = arith.constant 0 : i32
    %c0_i32_0 = arith.constant 0 : i32
    return %c0_i32, %arg0 : i32, i32
  }
  func.func @transform_3(%arg0: i32) -> (i32, i32) {
    %c0_i32 = arith.constant 0 : i32
    %c0_i32_0 = arith.constant 0 : i32
    return %c0_i32, %arg0 : i32, i32
  }
}

</mosaic_0001>

<llo_original>
// kernel: tpu_custom_call.1
$region0: #{tpu_custom_call.1}
  #allocation0 [shape = 'u32[]', space=smem, size = 0x4, offset = 0x4, fixed_abs, tag = 'smem constant byte address 0x4 - core index']
  #allocation1 [shape = 'u32[144,128]{1,0:T(1,128)}', space=vmem, size = 0x12000, scoped, tag = 'internal scratch']
  %s0 = inlined_call_operand.hbm [shape: f32[32,32], index: 0, kind: input, shape index: {}]
  %s1 = inlined_call_operand.hbm [shape: f32[1,5120], index: 1, kind: input, shape index: {}]
  %s2 = inlined_call_operand.hbm [shape: f32[1,5120], index: 2, kind: input, shape index: {}]
  %s3 = inlined_call_operand.hbm [shape: f32[1,5120], index: 3, kind: output, shape index: {}]
  %s4 = sld [smem:[#allocation0]]
  $region57: #{tpu_custom_call.1} parent=0
    _
  %s6 = ssub.s32 1, %s4
  %s7 = scalar_select 0, %s6, %s4
  $region1: #{tpu_custom_call.1} parent=0
    #allocation2 [shape = 'u8[16384]{0}', space=vmem, size = 0x4000, scoped, tag = 'input window, operand 0, single buffered']
    #allocation3 [shape = 's32[2]{0}', space=sflag, size = 0x8, scoped, tag = 'scoped memory for tpu_custom_call.1']
    #allocation4 [shape = 's32[2]{0}', space=sflag, size = 0x8, scoped, tag = 'scoped memory for tpu_custom_call.1']
    #allocation5 [shape = 'u8[20480]{0}', space=vmem, size = 0x5000, scoped, tag = 'input window, operand 1']
    #allocation6 [shape = 's32[2]{0}', space=sflag, size = 0x8, scoped, tag = 'scoped memory for tpu_custom_call.1']
    #allocation7 [shape = 'u8[20480]{0}', space=vmem, size = 0x5000, scoped, tag = 'input window, operand 2']
    #allocation8 [shape = 'u8[20480]{0}', space=vmem, size = 0x5000, scoped, tag = 'output window, operand 0']
    %8 = vsyncpa [#allocation3], 0
    %9 = vsyncpa [#allocation6], 0
    %s10 = scalar_lea.sflag [#allocation6], 1
    %11 = vsyncpa %s10, 0
    %12 = vsyncpa [#allocation4], 0
    %s13 = scalar_lea.sflag [#allocation4], 1
    %14 = vsyncpa %s13, 0
    loop: start=0, step=1, limit=4
    $region2: #{tpu_custom_call.1} parent=1 // loop_pre_header
      _
    $region3: #{tpu_custom_call.1} parent=1 // loop_header
      %s16 = sphi 0, %s20
      %p17 = scmp.ge.s32.totalorder %s16, 4
      %s24 = sphi 0, %s24
      %s26 = sphi 0, %s24
      %s27 = sphi 0, %s26
      %s41 = sphi 0, %s27
      %s47 = sphi 0, %s49
      %s50 = sphi 0, %s47
      %s51 = sphi 0, %s50
      %s67 = sphi 0, %s51
      %s73 = sphi 0, %s75
      %s76 = sphi 0, %s73
      %s77 = sphi 0, %s76
      %s93 = sphi 0, %s77
      %s99 = sphi 0, %s101
      %s102 = sphi 0, %s99
      %s103 = sphi 0, %s102
      %s119 = sphi 0, %s103
    $region4: #{tpu_custom_call.1} parent=1 // loop_header_branch
      %19 = sbr.rel (%p17) target = $region8
    $region5: #{tpu_custom_call.1} parent=1 // loop_body
      %s21 = ssub.s32 %s16, 1
      %s22 = ssub.s32 %s16, 2
      %s23 = sadd.s32 %s16, 1
      %s25 = sadd.s32 %s24, 1
      %p28 = scmp.eq.s32.totalorder %s16, 1
      %p29 = scmp.ne.s32.totalorder %s24, %s26
      %p30 = scmp.eq.s32.totalorder %s16, 0
      %p31 = por %p29, %p30
      %p32 = scmp.ne.s32.totalorder %s24, %s26
      %p33 = scmp.eq.s32.totalorder %s21, 1
      %p34 = por %p32, %p33
      %p35 = scmp.ne.s32.totalorder %s26, %s27
      %p36 = scmp.eq.s32.totalorder %s21, 0
      %p37 = por %p35, %p36
      %p38 = scmp.ne.s32.totalorder %s26, %s27
      %p39 = scmp.eq.s32.totalorder %s22, 1
      %p40 = por %p38, %p39
      %p42 = scmp.ne.s32.totalorder %s27, %s41
      %p43 = scmp.eq.s32.totalorder %s22, 0
      %p44 = por %p42, %p43
      %s45 = ssub.s32 %s16, %s23
      %p46 = scmp.eq.s32.totalorder %s45, 0
      %s48 = sadd.s32 %s47, 1
      %s49 = scalar_select %p46, %s47, %s48
      %p52 = pneg %p46
      %p53 = scmp.eq.s32.totalorder %s16, 1
      %p54 = por %p52, %p53
      %p55 = scmp.ne.s32.totalorder %s47, %s50
      %p56 = scmp.eq.s32.totalorder %s16, 0
      %p57 = por %p55, %p56
      %p58 = scmp.ne.s32.totalorder %s47, %s50
      %p59 = scmp.eq.s32.totalorder %s21, 1
      %p60 = por %p58, %p59
      %p61 = scmp.ne.s32.totalorder %s50, %s51
      %p62 = scmp.eq.s32.totalorder %s21, 0
      %p63 = por %p61, %p62
      %p64 = scmp.ne.s32.totalorder %s50, %s51
      %p65 = scmp.eq.s32.totalorder %s22, 1
      %p66 = por %p64, %p65
      %p68 = scmp.ne.s32.totalorder %s51, %s67
      %p69 = scmp.eq.s32.totalorder %s22, 0
      %p70 = por %p68, %p69
      %s71 = ssub.s32 %s16, %s23
      %p72 = scmp.eq.s32.totalorder %s71, 0
      %s74 = sadd.s32 %s73, 1
      %s75 = scalar_select %p72, %s73, %s74
      %p78 = pneg %p72
      %p79 = scmp.eq.s32.totalorder %s16, 1
      %p80 = por %p78, %p79
      %p81 = scmp.ne.s32.totalorder %s73, %s76
      %p82 = scmp.eq.s32.totalorder %s16, 0
      %p83 = por %p81, %p82
      %p84 = scmp.ne.s32.totalorder %s73, %s76
      %p85 = scmp.eq.s32.totalorder %s21, 1
      %p86 = por %p84, %p85
      %p87 = scmp.ne.s32.totalorder %s76, %s77
      %p88 = scmp.eq.s32.totalorder %s21, 0
      %p89 = por %p87, %p88
      %p90 = scmp.ne.s32.totalorder %s76, %s77
      %p91 = scmp.eq.s32.totalorder %s22, 1
      %p92 = por %p90, %p91
      %p94 = scmp.ne.s32.totalorder %s77, %s93
      %p95 = scmp.eq.s32.totalorder %s22, 0
      %p96 = por %p94, %p95
      %s97 = ssub.s32 %s16, %s23
      %p98 = scmp.eq.s32.totalorder %s97, 0
      %s100 = sadd.s32 %s99, 1
      %s101 = scalar_select %p98, %s99, %s100
      %p104 = pneg %p98
      %p105 = scmp.eq.s32.totalorder %s16, 1
      %p106 = por %p104, %p105
      %p107 = scmp.ne.s32.totalorder %s99, %s102
      %p108 = scmp.eq.s32.totalorder %s16, 0
      %p109 = por %p107, %p108
      %p110 = scmp.ne.s32.totalorder %s99, %s102
      %p111 = scmp.eq.s32.totalorder %s21, 1
      %p112 = por %p110, %p111
      %p113 = scmp.ne.s32.totalorder %s102, %s103
      %p114 = scmp.eq.s32.totalorder %s21, 0
      %p115 = por %p113, %p114
      %p116 = scmp.ne.s32.totalorder %s102, %s103
      %p117 = scmp.eq.s32.totalorder %s22, 1
      %p118 = por %p116, %p117
      %p120 = scmp.ne.s32.totalorder %s103, %s119
      %p121 = scmp.eq.s32.totalorder %s22, 0
      %p122 = por %p120, %p121
      %p123 = scmp.le.s32.totalorder 1, %s16
      %p124 = scmp.lt.s32.totalorder %s16, 3
      %p125 = pnand %p123, %p124
      %p126 = pneg %p125
      // Predicated region
      $region9: #{tpu_custom_call.1} parent=5 // pred_check
        _
      $region10: #{tpu_custom_call.1} parent=5 // pred_check_branch
        %128 = sbr.rel (%p125) target = $region12
      $region11: #{tpu_custom_call.1} parent=5 // pred_region
        %s129 = ssub.s32 %s16, 1
        // Predicated region
        $region13: #{tpu_custom_call.1} parent=11 // pred_check
          %p130 = pneg %p37
        $region14: #{tpu_custom_call.1} parent=11 // pred_check_branch
          %132 = sbr.rel (%p130) target = $region16
        $region15: #{tpu_custom_call.1} parent=11 // pred_region
          %s134 = ssub.s32 512, 512
          %135 = vsyncadd [#allocation3], %s134
          %s136 = sshll.u32 [#allocation2], 4
          %s137 = int_to_ptr.vmem [resolvable:$true] %s136
          %142 = dma.hbm_to_vmem [thread:$0]  %s0, 512, %s137, [#allocation3], 128, 128, 8
        $region16: #{tpu_custom_call.1} parent=11 // pred_fallthru
          _
      $region12: #{tpu_custom_call.1} parent=5 // pred_fallthru
        _
      %p143 = scmp.lt.s32.totalorder %s16, 2
      // Predicated region
      $region17: #{tpu_custom_call.1} parent=5 // pred_check
        %p144 = pneg %p143
      $region18: #{tpu_custom_call.1} parent=5 // pred_check_branch
        %146 = sbr.rel (%p144) target = $region20
      $region19: #{tpu_custom_call.1} parent=5 // pred_region
        // Predicated region
        $region21: #{tpu_custom_call.1} parent=19 // pred_check
          %p147 = pneg %p57
        $region22: #{tpu_custom_call.1} parent=19 // pred_check_branch
          %149 = sbr.rel (%p147) target = $region24
        $region23: #{tpu_custom_call.1} parent=19 // pred_region
          %s150 = sand.u32 %s16, 1
          %s151 = scalar_lea.sflag [#allocation6], %s150
          %s152 = sand.u32 %s47, 1
          %s153 = smul.addr %s152, 20
          %s154 = scalar_lea.vmem [#allocation5], %s153
          %s155 = smul.u32 20, %s16
          %s157 = ssub.s32 320, 320
          %158 = vsyncadd %s151, %s157
          %s159 = smul.addr %s155, 16
          %s160 = scalar_lea.hbm %s1, %s159
          %s162 = sshll.u32 %s154, 4
          %s163 = int_to_ptr.vmem [resolvable:$true] %s162
          %165 = dma.hbm_to_vmem [thread:$0]  %s160, 320, %s163, %s151
        $region24: #{tpu_custom_call.1} parent=19 // pred_fallthru
          _
        // Predicated region
        $region25: #{tpu_custom_call.1} parent=19 // pred_check
          %p166 = pneg %p83
        $region26: #{tpu_custom_call.1} parent=19 // pred_check_branch
          %168 = sbr.rel (%p166) target = $region28
        $region27: #{tpu_custom_call.1} parent=19 // pred_region
          %s169 = sand.u32 %s16, 1
          %s170 = scalar_lea.sflag [#allocation6], %s169
          %s171 = sand.u32 %s73, 1
          %s172 = smul.addr %s171, 20
          %s173 = scalar_lea.vmem [#allocation7], %s172
          %s174 = smul.u32 20, %s16
          %s176 = ssub.s32 320, 320
          %177 = vsyncadd %s170, %s176
          %s178 = smul.addr %s174, 16
          %s179 = scalar_lea.hbm %s2, %s178
          %s181 = sshll.u32 %s173, 4
          %s182 = int_to_ptr.vmem [resolvable:$true] %s181
          %184 = dma.hbm_to_vmem [thread:$0]  %s179, 320, %s182, %s170
        $region28: #{tpu_custom_call.1} parent=19 // pred_fallthru
          _
      $region20: #{tpu_custom_call.1} parent=5 // pred_fallthru
        _
      %p185 = scmp.le.s32.totalorder 1, %s16
      %p186 = scmp.lt.s32.totalorder %s16, 3
      %p187 = pnand %p185, %p186
      %p188 = pneg %p187
      // Predicated region
      $region29: #{tpu_custom_call.1} parent=5 // pred_check
        _
      $region30: #{tpu_custom_call.1} parent=5 // pred_check_branch
        %190 = sbr.rel (%p187) target = $region32
      $region31: #{tpu_custom_call.1} parent=5 // pred_region
        %s191 = ssub.s32 %s16, 1
        // Predicated region
        $region33: #{tpu_custom_call.1} parent=31 // pred_check
          %p192 = pneg %p37
        $region34: #{tpu_custom_call.1} parent=31 // pred_check_branch
          %194 = sbr.rel (%p192) target = $region36
        $region35: #{tpu_custom_call.1} parent=31 // pred_region
          %195 = dma.done [#allocation3], 512
        $region36: #{tpu_custom_call.1} parent=31 // pred_fallthru
          _
        %s196 = sand.u32 %s21, 1
        %s197 = scalar_lea.sflag [#allocation6], %s196
        %s198 = sand.u32 %s50, 1
        %s199 = smul.addr %s198, 20
        %s200 = scalar_lea.vmem [#allocation5], %s199
        // Predicated region
        $region37: #{tpu_custom_call.1} parent=31 // pred_check
          %p201 = pneg %p63
        $region38: #{tpu_custom_call.1} parent=31 // pred_check_branch
          %203 = sbr.rel (%p201) target = $region40
        $region39: #{tpu_custom_call.1} parent=31 // pred_region
          %204 = dma.done %s197, 320
        $region40: #{tpu_custom_call.1} parent=31 // pred_fallthru
          _
        %s205 = sand.u32 %s21, 1
        %s206 = scalar_lea.sflag [#allocation6], %s205
        %s207 = sand.u32 %s76, 1
        %s208 = smul.addr %s207, 20
        %s209 = scalar_lea.vmem [#allocation7], %s208
        // Predicated region
        $region41: #{tpu_custom_call.1} parent=31 // pred_check
          %p210 = pneg %p89
        $region42: #{tpu_custom_call.1} parent=31 // pred_check_branch
          %212 = sbr.rel (%p210) target = $region44
        $region43: #{tpu_custom_call.1} parent=31 // pred_region
          %213 = dma.done %s206, 320
        $region44: #{tpu_custom_call.1} parent=31 // pred_fallthru
          _
        %p214 = pneg %p37
        %p215 = pneg %p34
        %s216 = sand.u32 %s21, 1
        %s217 = scalar_lea.sflag [#allocation6], %s216
        %s218 = sand.u32 %s50, 1
        %s219 = smul.addr %s218, 20
        %s220 = scalar_lea.vmem [#allocation5], %s219
        %p221 = pneg %p63
        %p222 = pneg %p60
        %s223 = sand.u32 %s21, 1
        %s224 = scalar_lea.sflag [#allocation6], %s223
        %s225 = sand.u32 %s76, 1
        %s226 = smul.addr %s225, 20
        %s227 = scalar_lea.vmem [#allocation7], %s226
        %p228 = pneg %p89
        %p229 = pneg %p86
        %p230 = pneg %p115
        %p231 = pneg %p112
        %s232 = sand.u32 %s102, 1
        %s233 = scalar_lea.sflag [#allocation4], %s232
        %s234 = sand.u32 %s102, 1
        %s235 = smul.addr %s234, 20
        %s236 = scalar_lea.vmem [#allocation8], %s235
        %s237 = smul.u32 20, %s21
        %s238 = smul.u32 20, %s21
        %s239 = smul.u32 20, %s21
        %v240 = vld [vmem:[%s200] sm:$0xff]
        %v241 = vld [vmem:[%s200 + $0x8] sm:$0xff]
        %v242 = vld [vmem:[%s200 + $0x10] sm:$0xf]
        %v243 = vld [vmem:[%s209] sm:$0xff]
        %v244 = vld [vmem:[%s209 + $0x8] sm:$0xff]
        %v245 = vld [vmem:[%s209 + $0x10] sm:$0xf]
        %v246 = vld [vmem:[#allocation2] sm:$0xff]
        %v247 = vld [vmem:[#allocation2 + $0x8] sm:$0xff]
        %v248 = vld [vmem:[#allocation2 + $0x10] sm:$0xff]
        %v249 = vld [vmem:[#allocation2 + $0x18] sm:$0xff]
        %v250 = vmul.f32 %v240, 2.0
        %v251 = vmul.f32 %v241, 2.0
        %v252 = vmul.f32 %v242, 2.0
        %v253 = vfloor.f32 %v250
        %v254 = vfloor.f32 %v251
        %v255 = vfloor.f32 %v252
        %v256 = vmax.f32 %v253, 0.0
        %v257 = vmax.f32 %v254, 0.0
        %v258 = vmax.f32 %v255, 0.0
        %v259 = vmin.f32 %v256, 30.0
        %v260 = vmin.f32 %v257, 30.0
        %v261 = vmin.f32 %v258, 30.0
        %v262 = vcvt.f32.s32.to.zero.pseudo %v259
        %v263 = vcvt.f32.s32.to.zero.pseudo %v260
        %v264 = vcvt.f32.s32.to.zero.pseudo %v261
        %v265 = vsub.f32 %v243, -2.0
        %v266 = vsub.f32 %v244, -2.0
        %v267 = vsub.f32 %v245, -2.0
        %v268 = vmul.f32 %v265, 2.0
        %v269 = vmul.f32 %v266, 2.0
        %v270 = vmul.f32 %v267, 2.0
        %v271 = vfloor.f32 %v268
        %v272 = vfloor.f32 %v269
        %v273 = vfloor.f32 %v270
        %v274 = vmax.f32 %v271, 0.0
        %v275 = vmax.f32 %v272, 0.0
        %v276 = vmax.f32 %v273, 0.0
        %v277 = vmin.f32 %v274, 30.0
        %v278 = vmin.f32 %v275, 30.0
        %v279 = vmin.f32 %v276, 30.0
        %v280 = vcvt.f32.s32.to.zero.pseudo %v277
        %v281 = vcvt.f32.s32.to.zero.pseudo %v278
        %v282 = vcvt.f32.s32.to.zero.pseudo %v279
        %v283 = vcvt.s32.f32 %v262
        %v284 = vcvt.s32.f32 %v263
        %v285 = vcvt.s32.f32 %v264
        %v286 = vmul.f32 %v283, 0.5
        %v287 = vmul.f32 %v284, 0.5
        %v288 = vmul.f32 %v285, 0.5
        %v289 = vadd.f32 %v286, 0.0
        %v290 = vadd.f32 %v287, 0.0
        %v291 = vadd.f32 %v288, 0.0
        %v292 = vcvt.s32.f32 %v280
        %v293 = vcvt.s32.f32 %v281
        %v294 = vcvt.s32.f32 %v282
        %v295 = vmul.f32 %v292, 0.5
        %v296 = vmul.f32 %v293, 0.5
        %v297 = vmul.f32 %v294, 0.5
        %v298 = vadd.f32 %v295, -2.0
        %v299 = vadd.f32 %v296, -2.0
        %v300 = vadd.f32 %v297, -2.0
        %v301 = vsub.f32 %v240, %v289
        %v302 = vsub.f32 %v241, %v290
        %v303 = vsub.f32 %v242, %v291
        %v304 = vmul.f32 %v301, 2.0
        %v305 = vmul.f32 %v302, 2.0
        %v306 = vmul.f32 %v303, 2.0
        %v307 = vadd.f32 %v289, 0.5
        %v308 = vadd.f32 %v290, 0.5
        %v309 = vadd.f32 %v291, 0.5
        %v310 = vsub.f32 %v307, %v240
        %v311 = vsub.f32 %v308, %v241
        %v312 = vsub.f32 %v309, %v242
        %v313 = vmul.f32 %v310, 2.0
        %v314 = vmul.f32 %v311, 2.0
        %v315 = vmul.f32 %v312, 2.0
        %v316 = vsub.f32 %v243, %v298
        %v317 = vsub.f32 %v244, %v299
        %v318 = vsub.f32 %v245, %v300
        %v319 = vmul.f32 %v316, 2.0
        %v320 = vmul.f32 %v317, 2.0
        %v321 = vmul.f32 %v318, 2.0
        %v322 = vadd.f32 %v298, 0.5
        %v323 = vadd.f32 %v299, 0.5
        %v324 = vadd.f32 %v300, 0.5
        %v325 = vsub.f32 %v322, %v243
        %v326 = vsub.f32 %v323, %v244
        %v327 = vsub.f32 %v324, %v245
        %v328 = vmul.f32 %v325, 2.0
        %v329 = vmul.f32 %v326, 2.0
        %v330 = vmul.f32 %v327, 2.0
        %v331 = vlaneseq
        %v332 = vshrl.u32 %v331, 7
        %v333 = vadd.s32 %v332, 8
        %v334 = vadd.s32 %v332, 16
        %v335 = vadd.s32 %v332, 24
        %v336 = vlaneseq
        %v337 = vshrl.u32 %v336, 7
        %v338 = vsub.s32 0, %v337
        %v339 = vrot.slane %v262, %v338
        %v340 = vlaneseq
        %v341 = vshrl.u32 %v340, 7
        %v342 = vsub.s32 1, %v341
        %v343 = vrot.slane %v262, %v342
        %v344 = vlaneseq
        %v345 = vshrl.u32 %v344, 7
        %v346 = vsub.s32 2, %v345
        %v347 = vrot.slane %v262, %v346
        %v348 = vlaneseq
        %v349 = vshrl.u32 %v348, 7
        %v350 = vsub.s32 3, %v349
        %v351 = vrot.slane %v262, %v350
        %v352 = vlaneseq
        %v353 = vshrl.u32 %v352, 7
        %v354 = vsub.s32 4, %v353
        %v355 = vrot.slane %v262, %v354
        %v356 = vlaneseq
        %v357 = vshrl.u32 %v356, 7
        %v358 = vsub.s32 5, %v357
        %v359 = vrot.slane %v262, %v358
        %v360 = vlaneseq
        %v361 = vshrl.u32 %v360, 7
        %v362 = vsub.s32 6, %v361
        %v363 = vrot.slane %v262, %v362
        %v364 = vlaneseq
        %v365 = vshrl.u32 %v364, 7
        %v366 = vsub.s32 7, %v365
        %v367 = vrot.slane %v262, %v366
        %v368 = vlaneseq
        %v369 = vshrl.u32 %v368, 7
        %v370 = vsub.s32 0, %v369
        %v371 = vrot.slane %v263, %v370
        %v372 = vlaneseq
        %v373 = vshrl.u32 %v372, 7
        %v374 = vsub.s32 1, %v373
        %v375 = vrot.slane %v263, %v374
        %v376 = vlaneseq
        %v377 = vshrl.u32 %v376, 7
        %v378 = vsub.s32 2, %v377
        %v379 = vrot.slane %v263, %v378
        %v380 = vlaneseq
        %v381 = vshrl.u32 %v380, 7
        %v382 = vsub.s32 3, %v381
        %v383 = vrot.slane %v263, %v382
        %v384 = vlaneseq
        %v385 = vshrl.u32 %v384, 7
        %v386 = vsub.s32 4, %v385
        %v387 = vrot.slane %v263, %v386
        %v388 = vlaneseq
        %v389 = vshrl.u32 %v388, 7
        %v390 = vsub.s32 5, %v389
        %v391 = vrot.slane %v263, %v390
        %v392 = vlaneseq
        %v393 = vshrl.u32 %v392, 7
        %v394 = vsub.s32 6, %v393
        %v395 = vrot.slane %v263, %v394
        %v396 = vlaneseq
        %v397 = vshrl.u32 %v396, 7
        %v398 = vsub.s32 7, %v397
        %v399 = vrot.slane %v263, %v398
        %v400 = vlaneseq
        %v401 = vshrl.u32 %v400, 7
        %v402 = vsub.s32 0, %v401
        %v403 = vrot.slane %v264, %v402
        %v404 = vlaneseq
        %v405 = vshrl.u32 %v404, 7
        %v406 = vsub.s32 1, %v405
        %v407 = vrot.slane %v264, %v406
        %v408 = vlaneseq
        %v409 = vshrl.u32 %v408, 7
        %v410 = vsub.s32 2, %v409
        %v411 = vrot.slane %v264, %v410
        %v412 = vlaneseq
        %v413 = vshrl.u32 %v412, 7
        %v414 = vsub.s32 3, %v413
        %v415 = vrot.slane %v264, %v414
        %vm416 = vcmp.eq.s32.totalorder %v332, %v339
        %vm417 = vcmp.eq.s32.totalorder %v332, %v343
        %vm418 = vcmp.eq.s32.totalorder %v332, %v347
        %vm419 = vcmp.eq.s32.totalorder %v332, %v351
        %vm420 = vcmp.eq.s32.totalorder %v332, %v355
        %vm421 = vcmp.eq.s32.totalorder %v332, %v359
        %vm422 = vcmp.eq.s32.totalorder %v332, %v363
        %vm423 = vcmp.eq.s32.totalorder %v332, %v367
        %vm424 = vcmp.eq.s32.totalorder %v332, %v371
        %vm425 = vcmp.eq.s32.totalorder %v332, %v375
        %vm426 = vcmp.eq.s32.totalorder %v332, %v379
        %vm427 = vcmp.eq.s32.totalorder %v332, %v383
        %vm428 = vcmp.eq.s32.totalorder %v332, %v387
        %vm429 = vcmp.eq.s32.totalorder %v332, %v391
        %vm430 = vcmp.eq.s32.totalorder %v332, %v395
        %vm431 = vcmp.eq.s32.totalorder %v332, %v399
        %vm432 = vcmp.eq.s32.totalorder %v332, %v403
        %vm433 = vcmp.eq.s32.totalorder %v332, %v407
        %vm434 = vcmp.eq.s32.totalorder %v332, %v411
        %vm435 = vcmp.eq.s32.totalorder %v332, %v415
        %vm436 = vcmp.eq.s32.totalorder %v333, %v339
        %vm437 = vcmp.eq.s32.totalorder %v333, %v343
        %vm438 = vcmp.eq.s32.totalorder %v333, %v347
        %vm439 = vcmp.eq.s32.totalorder %v333, %v351
        %vm440 = vcmp.eq.s32.totalorder %v333, %v355
        %vm441 = vcmp.eq.s32.totalorder %v333, %v359
        %vm442 = vcmp.eq.s32.totalorder %v333, %v363
        %vm443 = vcmp.eq.s32.totalorder %v333, %v367
        %vm444 = vcmp.eq.s32.totalorder %v333, %v371
        %vm445 = vcmp.eq.s32.totalorder %v333, %v375
        %vm446 = vcmp.eq.s32.totalorder %v333, %v379
        %vm447 = vcmp.eq.s32.totalorder %v333, %v383
        %vm448 = vcmp.eq.s32.totalorder %v333, %v387
        %vm449 = vcmp.eq.s32.totalorder %v333, %v391
        %vm450 = vcmp.eq.s32.totalorder %v333, %v395
        %vm451 = vcmp.eq.s32.totalorder %v333, %v399
        %vm452 = vcmp.eq.s32.totalorder %v333, %v403
        %vm453 = vcmp.eq.s32.totalorder %v333, %v407
        %vm454 = vcmp.eq.s32.totalorder %v333, %v411
        %vm455 = vcmp.eq.s32.totalorder %v333, %v415
        %vm456 = vcmp.eq.s32.totalorder %v334, %v339
        %vm457 = vcmp.eq.s32.totalorder %v334, %v343
        %vm458 = vcmp.eq.s32.totalorder %v334, %v347
        %vm459 = vcmp.eq.s32.totalorder %v334, %v351
        %vm460 = vcmp.eq.s32.totalorder %v334, %v355
        %vm461 = vcmp.eq.s32.totalorder %v334, %v359
        %vm462 = vcmp.eq.s32.totalorder %v334, %v363
        %vm463 = vcmp.eq.s32.totalorder %v334, %v367
        %vm464 = vcmp.eq.s32.totalorder %v334, %v371
        %vm465 = vcmp.eq.s32.totalorder %v334, %v375
        %vm466 = vcmp.eq.s32.totalorder %v334, %v379
        %vm467 = vcmp.eq.s32.totalorder %v334, %v383
        %vm468 = vcmp.eq.s32.totalorder %v334, %v387
        %vm469 = vcmp.eq.s32.totalorder %v334, %v391
        %vm470 = vcmp.eq.s32.totalorder %v334, %v395
        %vm471 = vcmp.eq.s32.totalorder %v334, %v399
        %vm472 = vcmp.eq.s32.totalorder %v334, %v403
        %vm473 = vcmp.eq.s32.totalorder %v334, %v407
        %vm474 = vcmp.eq.s32.totalorder %v334, %v411
        %vm475 = vcmp.eq.s32.totalorder %v334, %v415
        %vm476 = vcmp.eq.s32.totalorder %v335, %v339
        %vm477 = vcmp.eq.s32.totalorder %v335, %v343
        %vm478 = vcmp.eq.s32.totalorder %v335, %v347
        %vm479 = vcmp.eq.s32.totalorder %v335, %v351
        %vm480 = vcmp.eq.s32.totalorder %v335, %v355
        %vm481 = vcmp.eq.s32.totalorder %v335, %v359
        %vm482 = vcmp.eq.s32.totalorder %v335, %v363
        %vm483 = vcmp.eq.s32.totalorder %v335, %v367
        %vm484 = vcmp.eq.s32.totalorder %v335, %v371
        %vm485 = vcmp.eq.s32.totalorder %v335, %v375
        %vm486 = vcmp.eq.s32.totalorder %v335, %v379
        %vm487 = vcmp.eq.s32.totalorder %v335, %v383
        %vm488 = vcmp.eq.s32.totalorder %v335, %v387
        %vm489 = vcmp.eq.s32.totalorder %v335, %v391
        %vm490 = vcmp.eq.s32.totalorder %v335, %v395
        %vm491 = vcmp.eq.s32.totalorder %v335, %v399
        %vm492 = vcmp.eq.s32.totalorder %v335, %v403
        %vm493 = vcmp.eq.s32.totalorder %v335, %v407
        %vm494 = vcmp.eq.s32.totalorder %v335, %v411
        %vm495 = vcmp.eq.s32.totalorder %v335, %v415
        %v499 = vlaneseq
        %v500 = vshrl.u32 %v499, 7
        %v501 = vsub.s32 0, %v500
        %v502 = vrot.slane %v313, %v501
        %v503 = vlaneseq
        %v504 = vshrl.u32 %v503, 7
        %v505 = vsub.s32 1, %v504
        %v506 = vrot.slane %v313, %v505
        %v507 = vlaneseq
        %v508 = vshrl.u32 %v507, 7
        %v509 = vsub.s32 2, %v508
        %v510 = vrot.slane %v313, %v509
        %v511 = vlaneseq
        %v512 = vshrl.u32 %v511, 7
        %v513 = vsub.s32 3, %v512
        %v514 = vrot.slane %v313, %v513
        %v515 = vlaneseq
        %v516 = vshrl.u32 %v515, 7
        %v517 = vsub.s32 4, %v516
        %v518 = vrot.slane %v313, %v517
        %v519 = vlaneseq
        %v520 = vshrl.u32 %v519, 7
        %v521 = vsub.s32 5, %v520
        %v522 = vrot.slane %v313, %v521
        %v523 = vlaneseq
        %v524 = vshrl.u32 %v523, 7
        %v525 = vsub.s32 6, %v524
        %v526 = vrot.slane %v313, %v525
        %v527 = vlaneseq
        %v528 = vshrl.u32 %v527, 7
        %v529 = vsub.s32 7, %v528
        %v530 = vrot.slane %v313, %v529
        %v531 = vlaneseq
        %v532 = vshrl.u32 %v531, 7
        %v533 = vsub.s32 0, %v532
        %v534 = vrot.slane %v314, %v533
        %v535 = vlaneseq
        %v536 = vshrl.u32 %v535, 7
        %v537 = vsub.s32 1, %v536
        %v538 = vrot.slane %v314, %v537
        %v539 = vlaneseq
        %v540 = vshrl.u32 %v539, 7
        %v541 = vsub.s32 2, %v540
        %v542 = vrot.slane %v314, %v541
        %v543 = vlaneseq
        %v544 = vshrl.u32 %v543, 7
        %v545 = vsub.s32 3, %v544
        %v546 = vrot.slane %v314, %v545
        %v547 = vlaneseq
        %v548 = vshrl.u32 %v547, 7
        %v549 = vsub.s32 4, %v548
        %v550 = vrot.slane %v314, %v549
        %v551 = vlaneseq
        %v552 = vshrl.u32 %v551, 7
        %v553 = vsub.s32 5, %v552
        %v554 = vrot.slane %v314, %v553
        %v555 = vlaneseq
        %v556 = vshrl.u32 %v555, 7
        %v557 = vsub.s32 6, %v556
        %v558 = vrot.slane %v314, %v557
        %v559 = vlaneseq
        %v560 = vshrl.u32 %v559, 7
        %v561 = vsub.s32 7, %v560
        %v562 = vrot.slane %v314, %v561
        %v563 = vlaneseq
        %v564 = vshrl.u32 %v563, 7
        %v565 = vsub.s32 0, %v564
        %v566 = vrot.slane %v315, %v565
        %v567 = vlaneseq
        %v568 = vshrl.u32 %v567, 7
        %v569 = vsub.s32 1, %v568
        %v570 = vrot.slane %v315, %v569
        %v571 = vlaneseq
        %v572 = vshrl.u32 %v571, 7
        %v573 = vsub.s32 2, %v572
        %v574 = vrot.slane %v315, %v573
        %v575 = vlaneseq
        %v576 = vshrl.u32 %v575, 7
        %v577 = vsub.s32 3, %v576
        %v578 = vrot.slane %v315, %v577
        %v599 = vsel %vm416, %v502, 0.0
        %v600 = vsel %vm417, %v506, 0.0
        %v601 = vsel %vm418, %v510, 0.0
        %v602 = vsel %vm419, %v514, 0.0
        %v603 = vsel %vm420, %v518, 0.0
        %v604 = vsel %vm421, %v522, 0.0
        %v605 = vsel %vm422, %v526, 0.0
        %v606 = vsel %vm423, %v530, 0.0
        %v607 = vsel %vm424, %v534, 0.0
        %v608 = vsel %vm425, %v538, 0.0
        %v609 = vsel %vm426, %v542, 0.0
        %v610 = vsel %vm427, %v546, 0.0
        %v611 = vsel %vm428, %v550, 0.0
        %v612 = vsel %vm429, %v554, 0.0
        %v613 = vsel %vm430, %v558, 0.0
        %v614 = vsel %vm431, %v562, 0.0
        %v615 = vsel %vm432, %v566, 0.0
        %v616 = vsel %vm433, %v570, 0.0
        %v617 = vsel %vm434, %v574, 0.0
        %v618 = vsel %vm435, %v578, 0.0
        %v619 = vsel %vm436, %v502, 0.0
        %v620 = vsel %vm437, %v506, 0.0
        %v621 = vsel %vm438, %v510, 0.0
        %v622 = vsel %vm439, %v514, 0.0
        %v623 = vsel %vm440, %v518, 0.0
        %v624 = vsel %vm441, %v522, 0.0
        %v625 = vsel %vm442, %v526, 0.0
        %v626 = vsel %vm443, %v530, 0.0
        %v627 = vsel %vm444, %v534, 0.0
        %v628 = vsel %vm445, %v538, 0.0
        %v629 = vsel %vm446, %v542, 0.0
        %v630 = vsel %vm447, %v546, 0.0
        %v631 = vsel %vm448, %v550, 0.0
        %v632 = vsel %vm449, %v554, 0.0
        %v633 = vsel %vm450, %v558, 0.0
        %v634 = vsel %vm451, %v562, 0.0
        %v635 = vsel %vm452, %v566, 0.0
        %v636 = vsel %vm453, %v570, 0.0
        %v637 = vsel %vm454, %v574, 0.0
        %v638 = vsel %vm455, %v578, 0.0
        %v639 = vsel %vm456, %v502, 0.0
        %v640 = vsel %vm457, %v506, 0.0
        %v641 = vsel %vm458, %v510, 0.0
        %v642 = vsel %vm459, %v514, 0.0
        %v643 = vsel %vm460, %v518, 0.0
        %v644 = vsel %vm461, %v522, 0.0
        %v645 = vsel %vm462, %v526, 0.0
        %v646 = vsel %vm463, %v530, 0.0
        %v647 = vsel %vm464, %v534, 0.0
        %v648 = vsel %vm465, %v538, 0.0
        %v649 = vsel %vm466, %v542, 0.0
        %v650 = vsel %vm467, %v546, 0.0
        %v651 = vsel %vm468, %v550, 0.0
        %v652 = vsel %vm469, %v554, 0.0
        %v653 = vsel %vm470, %v558, 0.0
        %v654 = vsel %vm471, %v562, 0.0
        %v655 = vsel %vm472, %v566, 0.0
        %v656 = vsel %vm473, %v570, 0.0
        %v657 = vsel %vm474, %v574, 0.0
        %v658 = vsel %vm475, %v578, 0.0
        %v659 = vsel %vm476, %v502, 0.0
        %v660 = vsel %vm477, %v506, 0.0
        %v661 = vsel %vm478, %v510, 0.0
        %v662 = vsel %vm479, %v514, 0.0
        %v663 = vsel %vm480, %v518, 0.0
        %v664 = vsel %vm481, %v522, 0.0
        %v665 = vsel %vm482, %v526, 0.0
        %v666 = vsel %vm483, %v530, 0.0
        %v667 = vsel %vm484, %v534, 0.0
        %v668 = vsel %vm485, %v538, 0.0
        %v669 = vsel %vm486, %v542, 0.0
        %v670 = vsel %vm487, %v546, 0.0
        %v671 = vsel %vm488, %v550, 0.0
        %v672 = vsel %vm489, %v554, 0.0
        %v673 = vsel %vm490, %v558, 0.0
        %v674 = vsel %vm491, %v562, 0.0
        %v675 = vsel %vm492, %v566, 0.0
        %v676 = vsel %vm493, %v570, 0.0
        %v677 = vsel %vm494, %v574, 0.0
        %v678 = vsel %vm495, %v578, 0.0
        %v679 = vadd.s32 %v262, 1
        %v680 = vadd.s32 %v263, 1
        %v681 = vadd.s32 %v264, 1
        %v682 = vlaneseq
        %v683 = vshrl.u32 %v682, 7
        %v684 = vsub.s32 0, %v683
        %v685 = vrot.slane %v679, %v684
        %v686 = vlaneseq
        %v687 = vshrl.u32 %v686, 7
        %v688 = vsub.s32 1, %v687
        %v689 = vrot.slane %v679, %v688
        %v690 = vlaneseq
        %v691 = vshrl.u32 %v690, 7
        %v692 = vsub.s32 2, %v691
        %v693 = vrot.slane %v679, %v692
        %v694 = vlaneseq
        %v695 = vshrl.u32 %v694, 7
        %v696 = vsub.s32 3, %v695
        %v697 = vrot.slane %v679, %v696
        %v698 = vlaneseq
        %v699 = vshrl.u32 %v698, 7
        %v700 = vsub.s32 4, %v699
        %v701 = vrot.slane %v679, %v700
        %v702 = vlaneseq
        %v703 = vshrl.u32 %v702, 7
        %v704 = vsub.s32 5, %v703
        %v705 = vrot.slane %v679, %v704
        %v706 = vlaneseq
        %v707 = vshrl.u32 %v706, 7
        %v708 = vsub.s32 6, %v707
        %v709 = vrot.slane %v679, %v708
        %v710 = vlaneseq
        %v711 = vshrl.u32 %v710, 7
        %v712 = vsub.s32 7, %v711
        %v713 = vrot.slane %v679, %v712
        %v714 = vlaneseq
        %v715 = vshrl.u32 %v714, 7
        %v716 = vsub.s32 0, %v715
        %v717 = vrot.slane %v680, %v716
        %v718 = vlaneseq
        %v719 = vshrl.u32 %v718, 7
        %v720 = vsub.s32 1, %v719
        %v721 = vrot.slane %v680, %v720
        %v722 = vlaneseq
        %v723 = vshrl.u32 %v722, 7
        %v724 = vsub.s32 2, %v723
        %v725 = vrot.slane %v680, %v724
        %v726 = vlaneseq
        %v727 = vshrl.u32 %v726, 7
        %v728 = vsub.s32 3, %v727
        %v729 = vrot.slane %v680, %v728
        %v730 = vlaneseq
        %v731 = vshrl.u32 %v730, 7
        %v732 = vsub.s32 4, %v731
        %v733 = vrot.slane %v680, %v732
        %v734 = vlaneseq
        %v735 = vshrl.u32 %v734, 7
        %v736 = vsub.s32 5, %v735
        %v737 = vrot.slane %v680, %v736
        %v738 = vlaneseq
        %v739 = vshrl.u32 %v738, 7
        %v740 = vsub.s32 6, %v739
        %v741 = vrot.slane %v680, %v740
        %v742 = vlaneseq
        %v743 = vshrl.u32 %v742, 7
        %v744 = vsub.s32 7, %v743
        %v745 = vrot.slane %v680, %v744
        %v746 = vlaneseq
        %v747 = vshrl.u32 %v746, 7
        %v748 = vsub.s32 0, %v747
        %v749 = vrot.slane %v681, %v748
        %v750 = vlaneseq
        %v751 = vshrl.u32 %v750, 7
        %v752 = vsub.s32 1, %v751
        %v753 = vrot.slane %v681, %v752
        %v754 = vlaneseq
        %v755 = vshrl.u32 %v754, 7
        %v756 = vsub.s32 2, %v755
        %v757 = vrot.slane %v681, %v756
        %v758 = vlaneseq
        %v759 = vshrl.u32 %v758, 7
        %v760 = vsub.s32 3, %v759
        %v761 = vrot.slane %v681, %v760
        %vm762 = vcmp.eq.s32.totalorder %v332, %v685
        %vm763 = vcmp.eq.s32.totalorder %v332, %v689
        %vm764 = vcmp.eq.s32.totalorder %v332, %v693
        %vm765 = vcmp.eq.s32.totalorder %v332, %v697
        %vm766 = vcmp.eq.s32.totalorder %v332, %v701
        %vm767 = vcmp.eq.s32.totalorder %v332, %v705
        %vm768 = vcmp.eq.s32.totalorder %v332, %v709
        %vm769 = vcmp.eq.s32.totalorder %v332, %v713
        %vm770 = vcmp.eq.s32.totalorder %v332, %v717
        %vm771 = vcmp.eq.s32.totalorder %v332, %v721
        %vm772 = vcmp.eq.s32.totalorder %v332, %v725
        %vm773 = vcmp.eq.s32.totalorder %v332, %v729
        %vm774 = vcmp.eq.s32.totalorder %v332, %v733
        %vm775 = vcmp.eq.s32.totalorder %v332, %v737
        %vm776 = vcmp.eq.s32.totalorder %v332, %v741
        %vm777 = vcmp.eq.s32.totalorder %v332, %v745
        %vm778 = vcmp.eq.s32.totalorder %v332, %v749
        %vm779 = vcmp.eq.s32.totalorder %v332, %v753
        %vm780 = vcmp.eq.s32.totalorder %v332, %v757
        %vm781 = vcmp.eq.s32.totalorder %v332, %v761
        %vm782 = vcmp.eq.s32.totalorder %v333, %v685
        %vm783 = vcmp.eq.s32.totalorder %v333, %v689
        %vm784 = vcmp.eq.s32.totalorder %v333, %v693
        %vm785 = vcmp.eq.s32.totalorder %v333, %v697
        %vm786 = vcmp.eq.s32.totalorder %v333, %v701
        %vm787 = vcmp.eq.s32.totalorder %v333, %v705
        %vm788 = vcmp.eq.s32.totalorder %v333, %v709
        %vm789 = vcmp.eq.s32.totalorder %v333, %v713
        %vm790 = vcmp.eq.s32.totalorder %v333, %v717
        %vm791 = vcmp.eq.s32.totalorder %v333, %v721
        %vm792 = vcmp.eq.s32.totalorder %v333, %v725
        %vm793 = vcmp.eq.s32.totalorder %v333, %v729
        %vm794 = vcmp.eq.s32.totalorder %v333, %v733
        %vm795 = vcmp.eq.s32.totalorder %v333, %v737
        %vm796 = vcmp.eq.s32.totalorder %v333, %v741
        %vm797 = vcmp.eq.s32.totalorder %v333, %v745
        %vm798 = vcmp.eq.s32.totalorder %v333, %v749
        %vm799 = vcmp.eq.s32.totalorder %v333, %v753
        %vm800 = vcmp.eq.s32.totalorder %v333, %v757
        %vm801 = vcmp.eq.s32.totalorder %v333, %v761
        %vm802 = vcmp.eq.s32.totalorder %v334, %v685
        %vm803 = vcmp.eq.s32.totalorder %v334, %v689
        %vm804 = vcmp.eq.s32.totalorder %v334, %v693
        %vm805 = vcmp.eq.s32.totalorder %v334, %v697
        %vm806 = vcmp.eq.s32.totalorder %v334, %v701
        %vm807 = vcmp.eq.s32.totalorder %v334, %v705
        %vm808 = vcmp.eq.s32.totalorder %v334, %v709
        %vm809 = vcmp.eq.s32.totalorder %v334, %v713
        %vm810 = vcmp.eq.s32.totalorder %v334, %v717
        %vm811 = vcmp.eq.s32.totalorder %v334, %v721
        %vm812 = vcmp.eq.s32.totalorder %v334, %v725
        %vm813 = vcmp.eq.s32.totalorder %v334, %v729
        %vm814 = vcmp.eq.s32.totalorder %v334, %v733
        %vm815 = vcmp.eq.s32.totalorder %v334, %v737
        %vm816 = vcmp.eq.s32.totalorder %v334, %v741
        %vm817 = vcmp.eq.s32.totalorder %v334, %v745
        %vm818 = vcmp.eq.s32.totalorder %v334, %v749
        %vm819 = vcmp.eq.s32.totalorder %v334, %v753
        %vm820 = vcmp.eq.s32.totalorder %v334, %v757
        %vm821 = vcmp.eq.s32.totalorder %v334, %v761
        %vm822 = vcmp.eq.s32.totalorder %v335, %v685
        %vm823 = vcmp.eq.s32.totalorder %v335, %v689
        %vm824 = vcmp.eq.s32.totalorder %v335, %v693
        %vm825 = vcmp.eq.s32.totalorder %v335, %v697
        %vm826 = vcmp.eq.s32.totalorder %v335, %v701
        %vm827 = vcmp.eq.s32.totalorder %v335, %v705
        %vm828 = vcmp.eq.s32.totalorder %v335, %v709
        %vm829 = vcmp.eq.s32.totalorder %v335, %v713
        %vm830 = vcmp.eq.s32.totalorder %v335, %v717
        %vm831 = vcmp.eq.s32.totalorder %v335, %v721
        %vm832 = vcmp.eq.s32.totalorder %v335, %v725
        %vm833 = vcmp.eq.s32.totalorder %v335, %v729
        %vm834 = vcmp.eq.s32.totalorder %v335, %v733
        %vm835 = vcmp.eq.s32.totalorder %v335, %v737
        %vm836 = vcmp.eq.s32.totalorder %v335, %v741
        %vm837 = vcmp.eq.s32.totalorder %v335, %v745
        %vm838 = vcmp.eq.s32.totalorder %v335, %v749
        %vm839 = vcmp.eq.s32.totalorder %v335, %v753
        %vm840 = vcmp.eq.s32.totalorder %v335, %v757
        %vm841 = vcmp.eq.s32.totalorder %v335, %v761
        %v845 = vlaneseq
        %v846 = vshrl.u32 %v845, 7
        %v847 = vsub.s32 0, %v846
        %v848 = vrot.slane %v304, %v847
        %v849 = vlaneseq
        %v850 = vshrl.u32 %v849, 7
        %v851 = vsub.s32 1, %v850
        %v852 = vrot.slane %v304, %v851
        %v853 = vlaneseq
        %v854 = vshrl.u32 %v853, 7
        %v855 = vsub.s32 2, %v854
        %v856 = vrot.slane %v304, %v855
        %v857 = vlaneseq
        %v858 = vshrl.u32 %v857, 7
        %v859 = vsub.s32 3, %v858
        %v860 = vrot.slane %v304, %v859
        %v861 = vlaneseq
        %v862 = vshrl.u32 %v861, 7
        %v863 = vsub.s32 4, %v862
        %v864 = vrot.slane %v304, %v863
        %v865 = vlaneseq
        %v866 = vshrl.u32 %v865, 7
        %v867 = vsub.s32 5, %v866
        %v868 = vrot.slane %v304, %v867
        %v869 = vlaneseq
        %v870 = vshrl.u32 %v869, 7
        %v871 = vsub.s32 6, %v870
        %v872 = vrot.slane %v304, %v871
        %v873 = vlaneseq
        %v874 = vshrl.u32 %v873, 7
        %v875 = vsub.s32 7, %v874
        %v876 = vrot.slane %v304, %v875
        %v877 = vlaneseq
        %v878 = vshrl.u32 %v877, 7
        %v879 = vsub.s32 0, %v878
        %v880 = vrot.slane %v305, %v879
        %v881 = vlaneseq
        %v882 = vshrl.u32 %v881, 7
        %v883 = vsub.s32 1, %v882
        %v884 = vrot.slane %v305, %v883
        %v885 = vlaneseq
        %v886 = vshrl.u32 %v885, 7
        %v887 = vsub.s32 2, %v886
        %v888 = vrot.slane %v305, %v887
        %v889 = vlaneseq
        %v890 = vshrl.u32 %v889, 7
        %v891 = vsub.s32 3, %v890
        %v892 = vrot.slane %v305, %v891
        %v893 = vlaneseq
        %v894 = vshrl.u32 %v893, 7
        %v895 = vsub.s32 4, %v894
        %v896 = vrot.slane %v305, %v895
        %v897 = vlaneseq
        %v898 = vshrl.u32 %v897, 7
        %v899 = vsub.s32 5, %v898
        %v900 = vrot.slane %v305, %v899
        %v901 = vlaneseq
        %v902 = vshrl.u32 %v901, 7
        %v903 = vsub.s32 6, %v902
        %v904 = vrot.slane %v305, %v903
        %v905 = vlaneseq
        %v906 = vshrl.u32 %v905, 7
        %v907 = vsub.s32 7, %v906
        %v908 = vrot.slane %v305, %v907
        %v909 = vlaneseq
        %v910 = vshrl.u32 %v909, 7
        %v911 = vsub.s32 0, %v910
        %v912 = vrot.slane %v306, %v911
        %v913 = vlaneseq
        %v914 = vshrl.u32 %v913, 7
        %v915 = vsub.s32 1, %v914
        %v916 = vrot.slane %v306, %v915
        %v917 = vlaneseq
        %v918 = vshrl.u32 %v917, 7
        %v919 = vsub.s32 2, %v918
        %v920 = vrot.slane %v306, %v919
        %v921 = vlaneseq
        %v922 = vshrl.u32 %v921, 7
        %v923 = vsub.s32 3, %v922
        %v924 = vrot.slane %v306, %v923
        %v945 = vsel %vm762, %v848, 0.0
        %v946 = vsel %vm763, %v852, 0.0
        %v947 = vsel %vm764, %v856, 0.0
        %v948 = vsel %vm765, %v860, 0.0
        %v949 = vsel %vm766, %v864, 0.0
        %v950 = vsel %vm767, %v868, 0.0
        %v951 = vsel %vm768, %v872, 0.0
        %v952 = vsel %vm769, %v876, 0.0
        %v953 = vsel %vm770, %v880, 0.0
        %v954 = vsel %vm771, %v884, 0.0
        %v955 = vsel %vm772, %v888, 0.0
        %v956 = vsel %vm773, %v892, 0.0
        %v957 = vsel %vm774, %v896, 0.0
        %v958 = vsel %vm775, %v900, 0.0
        %v959 = vsel %vm776, %v904, 0.0
        %v960 = vsel %vm777, %v908, 0.0
        %v961 = vsel %vm778, %v912, 0.0
        %v962 = vsel %vm779, %v916, 0.0
        %v963 = vsel %vm780, %v920, 0.0
        %v964 = vsel %vm781, %v924, 0.0
        %v965 = vsel %vm782, %v848, 0.0
        %v966 = vsel %vm783, %v852, 0.0
        %v967 = vsel %vm784, %v856, 0.0
        %v968 = vsel %vm785, %v860, 0.0
        %v969 = vsel %vm786, %v864, 0.0
        %v970 = vsel %vm787, %v868, 0.0
        %v971 = vsel %vm788, %v872, 0.0
        %v972 = vsel %vm789, %v876, 0.0
        %v973 = vsel %vm790, %v880, 0.0
        %v974 = vsel %vm791, %v884, 0.0
        %v975 = vsel %vm792, %v888, 0.0
        %v976 = vsel %vm793, %v892, 0.0
        %v977 = vsel %vm794, %v896, 0.0
        %v978 = vsel %vm795, %v900, 0.0
        %v979 = vsel %vm796, %v904, 0.0
        %v980 = vsel %vm797, %v908, 0.0
        %v981 = vsel %vm798, %v912, 0.0
        %v982 = vsel %vm799, %v916, 0.0
        %v983 = vsel %vm800, %v920, 0.0
        %v984 = vsel %vm801, %v924, 0.0
        %v985 = vsel %vm802, %v848, 0.0
        %v986 = vsel %vm803, %v852, 0.0
        %v987 = vsel %vm804, %v856, 0.0
        %v988 = vsel %vm805, %v860, 0.0
        %v989 = vsel %vm806, %v864, 0.0
        %v990 = vsel %vm807, %v868, 0.0
        %v991 = vsel %vm808, %v872, 0.0
        %v992 = vsel %vm809, %v876, 0.0
        %v993 = vsel %vm810, %v880, 0.0
        %v994 = vsel %vm811, %v884, 0.0
        %v995 = vsel %vm812, %v888, 0.0
        %v996 = vsel %vm813, %v892, 0.0
        %v997 = vsel %vm814, %v896, 0.0
        %v998 = vsel %vm815, %v900, 0.0
        %v999 = vsel %vm816, %v904, 0.0
        %v1000 = vsel %vm817, %v908, 0.0
        %v1001 = vsel %vm818, %v912, 0.0
        %v1002 = vsel %vm819, %v916, 0.0
        %v1003 = vsel %vm820, %v920, 0.0
        %v1004 = vsel %vm821, %v924, 0.0
        %v1005 = vsel %vm822, %v848, 0.0
        %v1006 = vsel %vm823, %v852, 0.0
        %v1007 = vsel %vm824, %v856, 0.0
        %v1008 = vsel %vm825, %v860, 0.0
        %v1009 = vsel %vm826, %v864, 0.0
        %v1010 = vsel %vm827, %v868, 0.0
        %v1011 = vsel %vm828, %v872, 0.0
        %v1012 = vsel %vm829, %v876, 0.0
        %v1013 = vsel %vm830, %v880, 0.0
        %v1014 = vsel %vm831, %v884, 0.0
        %v1015 = vsel %vm832, %v888, 0.0
        %v1016 = vsel %vm833, %v892, 0.0
        %v1017 = vsel %vm834, %v896, 0.0
        %v1018 = vsel %vm835, %v900, 0.0
        %v1019 = vsel %vm836, %v904, 0.0
        %v1020 = vsel %vm837, %v908, 0.0
        %v1021 = vsel %vm838, %v912, 0.0
        %v1022 = vsel %vm839, %v916, 0.0
        %v1023 = vsel %vm840, %v920, 0.0
        %v1024 = vsel %vm841, %v924, 0.0
        %v1025 = vadd.f32 %v599, %v945
        %v1026 = vadd.f32 %v600, %v946
        %v1027 = vadd.f32 %v601, %v947
        %v1028 = vadd.f32 %v602, %v948
        %v1029 = vadd.f32 %v603, %v949
        %v1030 = vadd.f32 %v604, %v950
        %v1031 = vadd.f32 %v605, %v951
        %v1032 = vadd.f32 %v606, %v952
        %v1033 = vadd.f32 %v607, %v953
        %v1034 = vadd.f32 %v608, %v954
        %v1035 = vadd.f32 %v609, %v955
        %v1036 = vadd.f32 %v610, %v956
        %v1037 = vadd.f32 %v611, %v957
        %v1038 = vadd.f32 %v612, %v958
        %v1039 = vadd.f32 %v613, %v959
        %v1040 = vadd.f32 %v614, %v960
        %v1041 = vadd.f32 %v615, %v961
        %v1042 = vadd.f32 %v616, %v962
        %v1043 = vadd.f32 %v617, %v963
        %v1044 = vadd.f32 %v618, %v964
        %v1045 = vadd.f32 %v619, %v965
        %v1046 = vadd.f32 %v620, %v966
        %v1047 = vadd.f32 %v621, %v967
        %v1048 = vadd.f32 %v622, %v968
        %v1049 = vadd.f32 %v623, %v969
        %v1050 = vadd.f32 %v624, %v970
        %v1051 = vadd.f32 %v625, %v971
        %v1052 = vadd.f32 %v626, %v972
        %v1053 = vadd.f32 %v627, %v973
        %v1054 = vadd.f32 %v628, %v974
        %v1055 = vadd.f32 %v629, %v975
        %v1056 = vadd.f32 %v630, %v976
        %v1057 = vadd.f32 %v631, %v977
        %v1058 = vadd.f32 %v632, %v978
        %v1059 = vadd.f32 %v633, %v979
        %v1060 = vadd.f32 %v634, %v980
        %v1061 = vadd.f32 %v635, %v981
        %v1062 = vadd.f32 %v636, %v982
        %v1063 = vadd.f32 %v637, %v983
        %v1064 = vadd.f32 %v638, %v984
        %v1065 = vadd.f32 %v639, %v985
        %v1066 = vadd.f32 %v640, %v986
        %v1067 = vadd.f32 %v641, %v987
        %v1068 = vadd.f32 %v642, %v988
        %v1069 = vadd.f32 %v643, %v989
        %v1070 = vadd.f32 %v644, %v990
        %v1071 = vadd.f32 %v645, %v991
        %v1072 = vadd.f32 %v646, %v992
        %v1073 = vadd.f32 %v647, %v993
        %v1074 = vadd.f32 %v648, %v994
        %v1075 = vadd.f32 %v649, %v995
        %v1076 = vadd.f32 %v650, %v996
        %v1077 = vadd.f32 %v651, %v997
        %v1078 = vadd.f32 %v652, %v998
        %v1079 = vadd.f32 %v653, %v999
        %v1080 = vadd.f32 %v654, %v1000
        %v1081 = vadd.f32 %v655, %v1001
        %v1082 = vadd.f32 %v656, %v1002
        %v1083 = vadd.f32 %v657, %v1003
        %v1084 = vadd.f32 %v658, %v1004
        %v1085 = vadd.f32 %v659, %v1005
        %v1086 = vadd.f32 %v660, %v1006
        %v1087 = vadd.f32 %v661, %v1007
        %v1088 = vadd.f32 %v662, %v1008
        %v1089 = vadd.f32 %v663, %v1009
        %v1090 = vadd.f32 %v664, %v1010
        %v1091 = vadd.f32 %v665, %v1011
        %v1092 = vadd.f32 %v666, %v1012
        %v1093 = vadd.f32 %v667, %v1013
        %v1094 = vadd.f32 %v668, %v1014
        %v1095 = vadd.f32 %v669, %v1015
        %v1096 = vadd.f32 %v670, %v1016
        %v1097 = vadd.f32 %v671, %v1017
        %v1098 = vadd.f32 %v672, %v1018
        %v1099 = vadd.f32 %v673, %v1019
        %v1100 = vadd.f32 %v674, %v1020
        %v1101 = vadd.f32 %v675, %v1021
        %v1102 = vadd.f32 %v676, %v1022
        %v1103 = vadd.f32 %v677, %v1023
        %v1104 = vadd.f32 %v678, %v1024
        %v1105 = vlaneseq
        %v1106 = vshrl.u32 %v1105, 7
        %v1107 = vsub.s32 0, %v1106
        %v1108 = vrot.slane %v280, %v1107
        %v1109 = vlaneseq
        %v1110 = vshrl.u32 %v1109, 7
        %v1111 = vsub.s32 1, %v1110
        %v1112 = vrot.slane %v280, %v1111
        %v1113 = vlaneseq
        %v1114 = vshrl.u32 %v1113, 7
        %v1115 = vsub.s32 2, %v1114
        %v1116 = vrot.slane %v280, %v1115
        %v1117 = vlaneseq
        %v1118 = vshrl.u32 %v1117, 7
        %v1119 = vsub.s32 3, %v1118
        %v1120 = vrot.slane %v280, %v1119
        %v1121 = vlaneseq
        %v1122 = vshrl.u32 %v1121, 7
        %v1123 = vsub.s32 4, %v1122
        %v1124 = vrot.slane %v280, %v1123
        %v1125 = vlaneseq
        %v1126 = vshrl.u32 %v1125, 7
        %v1127 = vsub.s32 5, %v1126
        %v1128 = vrot.slane %v280, %v1127
        %v1129 = vlaneseq
        %v1130 = vshrl.u32 %v1129, 7
        %v1131 = vsub.s32 6, %v1130
        %v1132 = vrot.slane %v280, %v1131
        %v1133 = vlaneseq
        %v1134 = vshrl.u32 %v1133, 7
        %v1135 = vsub.s32 7, %v1134
        %v1136 = vrot.slane %v280, %v1135
        %v1137 = vlaneseq
        %v1138 = vshrl.u32 %v1137, 7
        %v1139 = vsub.s32 0, %v1138
        %v1140 = vrot.slane %v281, %v1139
        %v1141 = vlaneseq
        %v1142 = vshrl.u32 %v1141, 7
        %v1143 = vsub.s32 1, %v1142
        %v1144 = vrot.slane %v281, %v1143
        %v1145 = vlaneseq
        %v1146 = vshrl.u32 %v1145, 7
        %v1147 = vsub.s32 2, %v1146
        %v1148 = vrot.slane %v281, %v1147
        %v1149 = vlaneseq
        %v1150 = vshrl.u32 %v1149, 7
        %v1151 = vsub.s32 3, %v1150
        %v1152 = vrot.slane %v281, %v1151
        %v1153 = vlaneseq
        %v1154 = vshrl.u32 %v1153, 7
        %v1155 = vsub.s32 4, %v1154
        %v1156 = vrot.slane %v281, %v1155
        %v1157 = vlaneseq
        %v1158 = vshrl.u32 %v1157, 7
        %v1159 = vsub.s32 5, %v1158
        %v1160 = vrot.slane %v281, %v1159
        %v1161 = vlaneseq
        %v1162 = vshrl.u32 %v1161, 7
        %v1163 = vsub.s32 6, %v1162
        %v1164 = vrot.slane %v281, %v1163
        %v1165 = vlaneseq
        %v1166 = vshrl.u32 %v1165, 7
        %v1167 = vsub.s32 7, %v1166
        %v1168 = vrot.slane %v281, %v1167
        %v1169 = vlaneseq
        %v1170 = vshrl.u32 %v1169, 7
        %v1171 = vsub.s32 0, %v1170
        %v1172 = vrot.slane %v282, %v1171
        %v1173 = vlaneseq
        %v1174 = vshrl.u32 %v1173, 7
        %v1175 = vsub.s32 1, %v1174
        %v1176 = vrot.slane %v282, %v1175
        %v1177 = vlaneseq
        %v1178 = vshrl.u32 %v1177, 7
        %v1179 = vsub.s32 2, %v1178
        %v1180 = vrot.slane %v282, %v1179
        %v1181 = vlaneseq
        %v1182 = vshrl.u32 %v1181, 7
        %v1183 = vsub.s32 3, %v1182
        %v1184 = vrot.slane %v282, %v1183
        %vm1185 = vcmp.eq.s32.totalorder %v332, %v1108
        %vm1186 = vcmp.eq.s32.totalorder %v332, %v1112
        %vm1187 = vcmp.eq.s32.totalorder %v332, %v1116
        %vm1188 = vcmp.eq.s32.totalorder %v332, %v1120
        %vm1189 = vcmp.eq.s32.totalorder %v332, %v1124
        %vm1190 = vcmp.eq.s32.totalorder %v332, %v1128
        %vm1191 = vcmp.eq.s32.totalorder %v332, %v1132
        %vm1192 = vcmp.eq.s32.totalorder %v332, %v1136
        %vm1193 = vcmp.eq.s32.totalorder %v332, %v1140
        %vm1194 = vcmp.eq.s32.totalorder %v332, %v1144
        %vm1195 = vcmp.eq.s32.totalorder %v332, %v1148
        %vm1196 = vcmp.eq.s32.totalorder %v332, %v1152
        %vm1197 = vcmp.eq.s32.totalorder %v332, %v1156
        %vm1198 = vcmp.eq.s32.totalorder %v332, %v1160
        %vm1199 = vcmp.eq.s32.totalorder %v332, %v1164
        %vm1200 = vcmp.eq.s32.totalorder %v332, %v1168
        %vm1201 = vcmp.eq.s32.totalorder %v332, %v1172
        %vm1202 = vcmp.eq.s32.totalorder %v332, %v1176
        %vm1203 = vcmp.eq.s32.totalorder %v332, %v1180
        %vm1204 = vcmp.eq.s32.totalorder %v332, %v1184
        %vm1205 = vcmp.eq.s32.totalorder %v333, %v1108
        %vm1206 = vcmp.eq.s32.totalorder %v333, %v1112
        %vm1207 = vcmp.eq.s32.totalorder %v333, %v1116
        %vm1208 = vcmp.eq.s32.totalorder %v333, %v1120
        %vm1209 = vcmp.eq.s32.totalorder %v333, %v1124
        %vm1210 = vcmp.eq.s32.totalorder %v333, %v1128
        %vm1211 = vcmp.eq.s32.totalorder %v333, %v1132
        %vm1212 = vcmp.eq.s32.totalorder %v333, %v1136
        %vm1213 = vcmp.eq.s32.totalorder %v333, %v1140
        %vm1214 = vcmp.eq.s32.totalorder %v333, %v1144
        %vm1215 = vcmp.eq.s32.totalorder %v333, %v1148
        %vm1216 = vcmp.eq.s32.totalorder %v333, %v1152
        %vm1217 = vcmp.eq.s32.totalorder %v333, %v1156
        %vm1218 = vcmp.eq.s32.totalorder %v333, %v1160
        %vm1219 = vcmp.eq.s32.totalorder %v333, %v1164
        %vm1220 = vcmp.eq.s32.totalorder %v333, %v1168
        %vm1221 = vcmp.eq.s32.totalorder %v333, %v1172
        %vm1222 = vcmp.eq.s32.totalorder %v333, %v1176
        %vm1223 = vcmp.eq.s32.totalorder %v333, %v1180
        %vm1224 = vcmp.eq.s32.totalorder %v333, %v1184
        %vm1225 = vcmp.eq.s32.totalorder %v334, %v1108
        %vm1226 = vcmp.eq.s32.totalorder %v334, %v1112
        %vm1227 = vcmp.eq.s32.totalorder %v334, %v1116
        %vm1228 = vcmp.eq.s32.totalorder %v334, %v1120
        %vm1229 = vcmp.eq.s32.totalorder %v334, %v1124
        %vm1230 = vcmp.eq.s32.totalorder %v334, %v1128
        %vm1231 = vcmp.eq.s32.totalorder %v334, %v1132
        %vm1232 = vcmp.eq.s32.totalorder %v334, %v1136
        %vm1233 = vcmp.eq.s32.totalorder %v334, %v1140
        %vm1234 = vcmp.eq.s32.totalorder %v334, %v1144
        %vm1235 = vcmp.eq.s32.totalorder %v334, %v1148
        %vm1236 = vcmp.eq.s32.totalorder %v334, %v1152
        %vm1237 = vcmp.eq.s32.totalorder %v334, %v1156
        %vm1238 = vcmp.eq.s32.totalorder %v334, %v1160
        %vm1239 = vcmp.eq.s32.totalorder %v334, %v1164
        %vm1240 = vcmp.eq.s32.totalorder %v334, %v1168
        %vm1241 = vcmp.eq.s32.totalorder %v334, %v1172
        %vm1242 = vcmp.eq.s32.totalorder %v334, %v1176
        %vm1243 = vcmp.eq.s32.totalorder %v334, %v1180
        %vm1244 = vcmp.eq.s32.totalorder %v334, %v1184
        %vm1245 = vcmp.eq.s32.totalorder %v335, %v1108
        %vm1246 = vcmp.eq.s32.totalorder %v335, %v1112
        %vm1247 = vcmp.eq.s32.totalorder %v335, %v1116
        %vm1248 = vcmp.eq.s32.totalorder %v335, %v1120
        %vm1249 = vcmp.eq.s32.totalorder %v335, %v1124
        %vm1250 = vcmp.eq.s32.totalorder %v335, %v1128
        %vm1251 = vcmp.eq.s32.totalorder %v335, %v1132
        %vm1252 = vcmp.eq.s32.totalorder %v335, %v1136
        %vm1253 = vcmp.eq.s32.totalorder %v335, %v1140
        %vm1254 = vcmp.eq.s32.totalorder %v335, %v1144
        %vm1255 = vcmp.eq.s32.totalorder %v335, %v1148
        %vm1256 = vcmp.eq.s32.totalorder %v335, %v1152
        %vm1257 = vcmp.eq.s32.totalorder %v335, %v1156
        %vm1258 = vcmp.eq.s32.totalorder %v335, %v1160
        %vm1259 = vcmp.eq.s32.totalorder %v335, %v1164
        %vm1260 = vcmp.eq.s32.totalorder %v335, %v1168
        %vm1261 = vcmp.eq.s32.totalorder %v335, %v1172
        %vm1262 = vcmp.eq.s32.totalorder %v335, %v1176
        %vm1263 = vcmp.eq.s32.totalorder %v335, %v1180
        %vm1264 = vcmp.eq.s32.totalorder %v335, %v1184
        %v1268 = vlaneseq
        %v1269 = vshrl.u32 %v1268, 7
        %v1270 = vsub.s32 0, %v1269
        %v1271 = vrot.slane %v328, %v1270
        %v1272 = vlaneseq
        %v1273 = vshrl.u32 %v1272, 7
        %v1274 = vsub.s32 1, %v1273
        %v1275 = vrot.slane %v328, %v1274
        %v1276 = vlaneseq
        %v1277 = vshrl.u32 %v1276, 7
        %v1278 = vsub.s32 2, %v1277
        %v1279 = vrot.slane %v328, %v1278
        %v1280 = vlaneseq
        %v1281 = vshrl.u32 %v1280, 7
        %v1282 = vsub.s32 3, %v1281
        %v1283 = vrot.slane %v328, %v1282
        %v1284 = vlaneseq
        %v1285 = vshrl.u32 %v1284, 7
        %v1286 = vsub.s32 4, %v1285
        %v1287 = vrot.slane %v328, %v1286
        %v1288 = vlaneseq
        %v1289 = vshrl.u32 %v1288, 7
        %v1290 = vsub.s32 5, %v1289
        %v1291 = vrot.slane %v328, %v1290
        %v1292 = vlaneseq
        %v1293 = vshrl.u32 %v1292, 7
        %v1294 = vsub.s32 6, %v1293
        %v1295 = vrot.slane %v328, %v1294
        %v1296 = vlaneseq
        %v1297 = vshrl.u32 %v1296, 7
        %v1298 = vsub.s32 7, %v1297
        %v1299 = vrot.slane %v328, %v1298
        %v1300 = vlaneseq
        %v1301 = vshrl.u32 %v1300, 7
        %v1302 = vsub.s32 0, %v1301
        %v1303 = vrot.slane %v329, %v1302
        %v1304 = vlaneseq
        %v1305 = vshrl.u32 %v1304, 7
        %v1306 = vsub.s32 1, %v1305
        %v1307 = vrot.slane %v329, %v1306
        %v1308 = vlaneseq
        %v1309 = vshrl.u32 %v1308, 7
        %v1310 = vsub.s32 2, %v1309
        %v1311 = vrot.slane %v329, %v1310
        %v1312 = vlaneseq
        %v1313 = vshrl.u32 %v1312, 7
        %v1314 = vsub.s32 3, %v1313
        %v1315 = vrot.slane %v329, %v1314
        %v1316 = vlaneseq
        %v1317 = vshrl.u32 %v1316, 7
        %v1318 = vsub.s32 4, %v1317
        %v1319 = vrot.slane %v329, %v1318
        %v1320 = vlaneseq
        %v1321 = vshrl.u32 %v1320, 7
        %v1322 = vsub.s32 5, %v1321
        %v1323 = vrot.slane %v329, %v1322
        %v1324 = vlaneseq
        %v1325 = vshrl.u32 %v1324, 7
        %v1326 = vsub.s32 6, %v1325
        %v1327 = vrot.slane %v329, %v1326
        %v1328 = vlaneseq
        %v1329 = vshrl.u32 %v1328, 7
        %v1330 = vsub.s32 7, %v1329
        %v1331 = vrot.slane %v329, %v1330
        %v1332 = vlaneseq
        %v1333 = vshrl.u32 %v1332, 7
        %v1334 = vsub.s32 0, %v1333
        %v1335 = vrot.slane %v330, %v1334
        %v1336 = vlaneseq
        %v1337 = vshrl.u32 %v1336, 7
        %v1338 = vsub.s32 1, %v1337
        %v1339 = vrot.slane %v330, %v1338
        %v1340 = vlaneseq
        %v1341 = vshrl.u32 %v1340, 7
        %v1342 = vsub.s32 2, %v1341
        %v1343 = vrot.slane %v330, %v1342
        %v1344 = vlaneseq
        %v1345 = vshrl.u32 %v1344, 7
        %v1346 = vsub.s32 3, %v1345
        %v1347 = vrot.slane %v330, %v1346
        %v1368 = vsel %vm1185, %v1271, 0.0
        %v1369 = vsel %vm1186, %v1275, 0.0
        %v1370 = vsel %vm1187, %v1279, 0.0
        %v1371 = vsel %vm1188, %v1283, 0.0
        %v1372 = vsel %vm1189, %v1287, 0.0
        %v1373 = vsel %vm1190, %v1291, 0.0
        %v1374 = vsel %vm1191, %v1295, 0.0
        %v1375 = vsel %vm1192, %v1299, 0.0
        %v1376 = vsel %vm1193, %v1303, 0.0
        %v1377 = vsel %vm1194, %v1307, 0.0
        %v1378 = vsel %vm1195, %v1311, 0.0
        %v1379 = vsel %vm1196, %v1315, 0.0
        %v1380 = vsel %vm1197, %v1319, 0.0
        %v1381 = vsel %vm1198, %v1323, 0.0
        %v1382 = vsel %vm1199, %v1327, 0.0
        %v1383 = vsel %vm1200, %v1331, 0.0
        %v1384 = vsel %vm1201, %v1335, 0.0
        %v1385 = vsel %vm1202, %v1339, 0.0
        %v1386 = vsel %vm1203, %v1343, 0.0
        %v1387 = vsel %vm1204, %v1347, 0.0
        %v1388 = vsel %vm1205, %v1271, 0.0
        %v1389 = vsel %vm1206, %v1275, 0.0
        %v1390 = vsel %vm1207, %v1279, 0.0
        %v1391 = vsel %vm1208, %v1283, 0.0
        %v1392 = vsel %vm1209, %v1287, 0.0
        %v1393 = vsel %vm1210, %v1291, 0.0
        %v1394 = vsel %vm1211, %v1295, 0.0
        %v1395 = vsel %vm1212, %v1299, 0.0
        %v1396 = vsel %vm1213, %v1303, 0.0
        %v1397 = vsel %vm1214, %v1307, 0.0
        %v1398 = vsel %vm1215, %v1311, 0.0
        %v1399 = vsel %vm1216, %v1315, 0.0
        %v1400 = vsel %vm1217, %v1319, 0.0
        %v1401 = vsel %vm1218, %v1323, 0.0
        %v1402 = vsel %vm1219, %v1327, 0.0
        %v1403 = vsel %vm1220, %v1331, 0.0
        %v1404 = vsel %vm1221, %v1335, 0.0
        %v1405 = vsel %vm1222, %v1339, 0.0
        %v1406 = vsel %vm1223, %v1343, 0.0
        %v1407 = vsel %vm1224, %v1347, 0.0
        %v1408 = vsel %vm1225, %v1271, 0.0
        %v1409 = vsel %vm1226, %v1275, 0.0
        %v1410 = vsel %vm1227, %v1279, 0.0
        %v1411 = vsel %vm1228, %v1283, 0.0
        %v1412 = vsel %vm1229, %v1287, 0.0
        %v1413 = vsel %vm1230, %v1291, 0.0
        %v1414 = vsel %vm1231, %v1295, 0.0
        %v1415 = vsel %vm1232, %v1299, 0.0
        %v1416 = vsel %vm1233, %v1303, 0.0
        %v1417 = vsel %vm1234, %v1307, 0.0
        %v1418 = vsel %vm1235, %v1311, 0.0
        %v1419 = vsel %vm1236, %v1315, 0.0
        %v1420 = vsel %vm1237, %v1319, 0.0
        %v1421 = vsel %vm1238, %v1323, 0.0
        %v1422 = vsel %vm1239, %v1327, 0.0
        %v1423 = vsel %vm1240, %v1331, 0.0
        %v1424 = vsel %vm1241, %v1335, 0.0
        %v1425 = vsel %vm1242, %v1339, 0.0
        %v1426 = vsel %vm1243, %v1343, 0.0
        %v1427 = vsel %vm1244, %v1347, 0.0
        %v1428 = vsel %vm1245, %v1271, 0.0
        %v1429 = vsel %vm1246, %v1275, 0.0
        %v1430 = vsel %vm1247, %v1279, 0.0
        %v1431 = vsel %vm1248, %v1283, 0.0
        %v1432 = vsel %vm1249, %v1287, 0.0
        %v1433 = vsel %vm1250, %v1291, 0.0
        %v1434 = vsel %vm1251, %v1295, 0.0
        %v1435 = vsel %vm1252, %v1299, 0.0
        %v1436 = vsel %vm1253, %v1303, 0.0
        %v1437 = vsel %vm1254, %v1307, 0.0
        %v1438 = vsel %vm1255, %v1311, 0.0
        %v1439 = vsel %vm1256, %v1315, 0.0
        %v1440 = vsel %vm1257, %v1319, 0.0
        %v1441 = vsel %vm1258, %v1323, 0.0
        %v1442 = vsel %vm1259, %v1327, 0.0
        %v1443 = vsel %vm1260, %v1331, 0.0
        %v1444 = vsel %vm1261, %v1335, 0.0
        %v1445 = vsel %vm1262, %v1339, 0.0
        %v1446 = vsel %vm1263, %v1343, 0.0
        %v1447 = vsel %vm1264, %v1347, 0.0
        %v1448 = vadd.s32 %v280, 1
        %v1449 = vadd.s32 %v281, 1
        %v1450 = vadd.s32 %v282, 1
        %v1451 = vlaneseq
        %v1452 = vshrl.u32 %v1451, 7
        %v1453 = vsub.s32 0, %v1452
        %v1454 = vrot.slane %v1448, %v1453
        %v1455 = vlaneseq
        %v1456 = vshrl.u32 %v1455, 7
        %v1457 = vsub.s32 1, %v1456
        %v1458 = vrot.slane %v1448, %v1457
        %v1459 = vlaneseq
        %v1460 = vshrl.u32 %v1459, 7
        %v1461 = vsub.s32 2, %v1460
        %v1462 = vrot.slane %v1448, %v1461
        %v1463 = vlaneseq
        %v1464 = vshrl.u32 %v1463, 7
        %v1465 = vsub.s32 3, %v1464
        %v1466 = vrot.slane %v1448, %v1465
        %v1467 = vlaneseq
        %v1468 = vshrl.u32 %v1467, 7
        %v1469 = vsub.s32 4, %v1468
        %v1470 = vrot.slane %v1448, %v1469
        %v1471 = vlaneseq
        %v1472 = vshrl.u32 %v1471, 7
        %v1473 = vsub.s32 5, %v1472
        %v1474 = vrot.slane %v1448, %v1473
        %v1475 = vlaneseq
        %v1476 = vshrl.u32 %v1475, 7
        %v1477 = vsub.s32 6, %v1476
        %v1478 = vrot.slane %v1448, %v1477
        %v1479 = vlaneseq
        %v1480 = vshrl.u32 %v1479, 7
        %v1481 = vsub.s32 7, %v1480
        %v1482 = vrot.slane %v1448, %v1481
        %v1483 = vlaneseq
        %v1484 = vshrl.u32 %v1483, 7
        %v1485 = vsub.s32 0, %v1484
        %v1486 = vrot.slane %v1449, %v1485
        %v1487 = vlaneseq
        %v1488 = vshrl.u32 %v1487, 7
        %v1489 = vsub.s32 1, %v1488
        %v1490 = vrot.slane %v1449, %v1489
        %v1491 = vlaneseq
        %v1492 = vshrl.u32 %v1491, 7
        %v1493 = vsub.s32 2, %v1492
        %v1494 = vrot.slane %v1449, %v1493
        %v1495 = vlaneseq
        %v1496 = vshrl.u32 %v1495, 7
        %v1497 = vsub.s32 3, %v1496
        %v1498 = vrot.slane %v1449, %v1497
        %v1499 = vlaneseq
        %v1500 = vshrl.u32 %v1499, 7
        %v1501 = vsub.s32 4, %v1500
        %v1502 = vrot.slane %v1449, %v1501
        %v1503 = vlaneseq
        %v1504 = vshrl.u32 %v1503, 7
        %v1505 = vsub.s32 5, %v1504
        %v1506 = vrot.slane %v1449, %v1505
        %v1507 = vlaneseq
        %v1508 = vshrl.u32 %v1507, 7
        %v1509 = vsub.s32 6, %v1508
        %v1510 = vrot.slane %v1449, %v1509
        %v1511 = vlaneseq
        %v1512 = vshrl.u32 %v1511, 7
        %v1513 = vsub.s32 7, %v1512
        %v1514 = vrot.slane %v1449, %v1513
        %v1515 = vlaneseq
        %v1516 = vshrl.u32 %v1515, 7
        %v1517 = vsub.s32 0, %v1516
        %v1518 = vrot.slane %v1450, %v1517
        %v1519 = vlaneseq
        %v1520 = vshrl.u32 %v1519, 7
        %v1521 = vsub.s32 1, %v1520
        %v1522 = vrot.slane %v1450, %v1521
        %v1523 = vlaneseq
        %v1524 = vshrl.u32 %v1523, 7
        %v1525 = vsub.s32 2, %v1524
        %v1526 = vrot.slane %v1450, %v1525
        %v1527 = vlaneseq
        %v1528 = vshrl.u32 %v1527, 7
        %v1529 = vsub.s32 3, %v1528
        %v1530 = vrot.slane %v1450, %v1529
        %vm1531 = vcmp.eq.s32.totalorder %v332, %v1454
        %vm1532 = vcmp.eq.s32.totalorder %v332, %v1458
        %vm1533 = vcmp.eq.s32.totalorder %v332, %v1462
        %vm1534 = vcmp.eq.s32.totalorder %v332, %v1466
        %vm1535 = vcmp.eq.s32.totalorder %v332, %v1470
        %vm1536 = vcmp.eq.s32.totalorder %v332, %v1474
        %vm1537 = vcmp.eq.s32.totalorder %v332, %v1478
        %vm1538 = vcmp.eq.s32.totalorder %v332, %v1482
        %vm1539 = vcmp.eq.s32.totalorder %v332, %v1486
        %vm1540 = vcmp.eq.s32.totalorder %v332, %v1490
        %vm1541 = vcmp.eq.s32.totalorder %v332, %v1494
        %vm1542 = vcmp.eq.s32.totalorder %v332, %v1498
        %vm1543 = vcmp.eq.s32.totalorder %v332, %v1502
        %vm1544 = vcmp.eq.s32.totalorder %v332, %v1506
        %vm1545 = vcmp.eq.s32.totalorder %v332, %v1510
        %vm1546 = vcmp.eq.s32.totalorder %v332, %v1514
        %vm1547 = vcmp.eq.s32.totalorder %v332, %v1518
        %vm1548 = vcmp.eq.s32.totalorder %v332, %v1522
        %vm1549 = vcmp.eq.s32.totalorder %v332, %v1526
        %vm1550 = vcmp.eq.s32.totalorder %v332, %v1530
        %vm1551 = vcmp.eq.s32.totalorder %v333, %v1454
        %vm1552 = vcmp.eq.s32.totalorder %v333, %v1458
        %vm1553 = vcmp.eq.s32.totalorder %v333, %v1462
        %vm1554 = vcmp.eq.s32.totalorder %v333, %v1466
        %vm1555 = vcmp.eq.s32.totalorder %v333, %v1470
        %vm1556 = vcmp.eq.s32.totalorder %v333, %v1474
        %vm1557 = vcmp.eq.s32.totalorder %v333, %v1478
        %vm1558 = vcmp.eq.s32.totalorder %v333, %v1482
        %vm1559 = vcmp.eq.s32.totalorder %v333, %v1486
        %vm1560 = vcmp.eq.s32.totalorder %v333, %v1490
        %vm1561 = vcmp.eq.s32.totalorder %v333, %v1494
        %vm1562 = vcmp.eq.s32.totalorder %v333, %v1498
        %vm1563 = vcmp.eq.s32.totalorder %v333, %v1502
        %vm1564 = vcmp.eq.s32.totalorder %v333, %v1506
        %vm1565 = vcmp.eq.s32.totalorder %v333, %v1510
        %vm1566 = vcmp.eq.s32.totalorder %v333, %v1514
        %vm1567 = vcmp.eq.s32.totalorder %v333, %v1518
        %vm1568 = vcmp.eq.s32.totalorder %v333, %v1522
        %vm1569 = vcmp.eq.s32.totalorder %v333, %v1526
        %vm1570 = vcmp.eq.s32.totalorder %v333, %v1530
        %vm1571 = vcmp.eq.s32.totalorder %v334, %v1454
        %vm1572 = vcmp.eq.s32.totalorder %v334, %v1458
        %vm1573 = vcmp.eq.s32.totalorder %v334, %v1462
        %vm1574 = vcmp.eq.s32.totalorder %v334, %v1466
        %vm1575 = vcmp.eq.s32.totalorder %v334, %v1470
        %vm1576 = vcmp.eq.s32.totalorder %v334, %v1474
        %vm1577 = vcmp.eq.s32.totalorder %v334, %v1478
        %vm1578 = vcmp.eq.s32.totalorder %v334, %v1482
        %vm1579 = vcmp.eq.s32.totalorder %v334, %v1486
        %vm1580 = vcmp.eq.s32.totalorder %v334, %v1490
        %vm1581 = vcmp.eq.s32.totalorder %v334, %v1494
        %vm1582 = vcmp.eq.s32.totalorder %v334, %v1498
        %vm1583 = vcmp.eq.s32.totalorder %v334, %v1502
        %vm1584 = vcmp.eq.s32.totalorder %v334, %v1506
        %vm1585 = vcmp.eq.s32.totalorder %v334, %v1510
        %vm1586 = vcmp.eq.s32.totalorder %v334, %v1514
        %vm1587 = vcmp.eq.s32.totalorder %v334, %v1518
        %vm1588 = vcmp.eq.s32.totalorder %v334, %v1522
        %vm1589 = vcmp.eq.s32.totalorder %v334, %v1526
        %vm1590 = vcmp.eq.s32.totalorder %v334, %v1530
        %vm1591 = vcmp.eq.s32.totalorder %v335, %v1454
        %vm1592 = vcmp.eq.s32.totalorder %v335, %v1458
        %vm1593 = vcmp.eq.s32.totalorder %v335, %v1462
        %vm1594 = vcmp.eq.s32.totalorder %v335, %v1466
        %vm1595 = vcmp.eq.s32.totalorder %v335, %v1470
        %vm1596 = vcmp.eq.s32.totalorder %v335, %v1474
        %vm1597 = vcmp.eq.s32.totalorder %v335, %v1478
        %vm1598 = vcmp.eq.s32.totalorder %v335, %v1482
        %vm1599 = vcmp.eq.s32.totalorder %v335, %v1486
        %vm1600 = vcmp.eq.s32.totalorder %v335, %v1490
        %vm1601 = vcmp.eq.s32.totalorder %v335, %v1494
        %vm1602 = vcmp.eq.s32.totalorder %v335, %v1498
        %vm1603 = vcmp.eq.s32.totalorder %v335, %v1502
        %vm1604 = vcmp.eq.s32.totalorder %v335, %v1506
        %vm1605 = vcmp.eq.s32.totalorder %v335, %v1510
        %vm1606 = vcmp.eq.s32.totalorder %v335, %v1514
        %vm1607 = vcmp.eq.s32.totalorder %v335, %v1518
        %vm1608 = vcmp.eq.s32.totalorder %v335, %v1522
        %vm1609 = vcmp.eq.s32.totalorder %v335, %v1526
        %vm1610 = vcmp.eq.s32.totalorder %v335, %v1530
        %v1614 = vlaneseq
        %v1615 = vshrl.u32 %v1614, 7
        %v1616 = vsub.s32 0, %v1615
        %v1617 = vrot.slane %v319, %v1616
        %v1618 = vlaneseq
        %v1619 = vshrl.u32 %v1618, 7
        %v1620 = vsub.s32 1, %v1619
        %v1621 = vrot.slane %v319, %v1620
        %v1622 = vlaneseq
        %v1623 = vshrl.u32 %v1622, 7
        %v1624 = vsub.s32 2, %v1623
        %v1625 = vrot.slane %v319, %v1624
        %v1626 = vlaneseq
        %v1627 = vshrl.u32 %v1626, 7
        %v1628 = vsub.s32 3, %v1627
        %v1629 = vrot.slane %v319, %v1628
        %v1630 = vlaneseq
        %v1631 = vshrl.u32 %v1630, 7
        %v1632 = vsub.s32 4, %v1631
        %v1633 = vrot.slane %v319, %v1632
        %v1634 = vlaneseq
        %v1635 = vshrl.u32 %v1634, 7
        %v1636 = vsub.s32 5, %v1635
        %v1637 = vrot.slane %v319, %v1636
        %v1638 = vlaneseq
        %v1639 = vshrl.u32 %v1638, 7
        %v1640 = vsub.s32 6, %v1639
        %v1641 = vrot.slane %v319, %v1640
        %v1642 = vlaneseq
        %v1643 = vshrl.u32 %v1642, 7
        %v1644 = vsub.s32 7, %v1643
        %v1645 = vrot.slane %v319, %v1644
        %v1646 = vlaneseq
        %v1647 = vshrl.u32 %v1646, 7
        %v1648 = vsub.s32 0, %v1647
        %v1649 = vrot.slane %v320, %v1648
        %v1650 = vlaneseq
        %v1651 = vshrl.u32 %v1650, 7
        %v1652 = vsub.s32 1, %v1651
        %v1653 = vrot.slane %v320, %v1652
        %v1654 = vlaneseq
        %v1655 = vshrl.u32 %v1654, 7
        %v1656 = vsub.s32 2, %v1655
        %v1657 = vrot.slane %v320, %v1656
        %v1658 = vlaneseq
        %v1659 = vshrl.u32 %v1658, 7
        %v1660 = vsub.s32 3, %v1659
        %v1661 = vrot.slane %v320, %v1660
        %v1662 = vlaneseq
        %v1663 = vshrl.u32 %v1662, 7
        %v1664 = vsub.s32 4, %v1663
        %v1665 = vrot.slane %v320, %v1664
        %v1666 = vlaneseq
        %v1667 = vshrl.u32 %v1666, 7
        %v1668 = vsub.s32 5, %v1667
        %v1669 = vrot.slane %v320, %v1668
        %v1670 = vlaneseq
        %v1671 = vshrl.u32 %v1670, 7
        %v1672 = vsub.s32 6, %v1671
        %v1673 = vrot.slane %v320, %v1672
        %v1674 = vlaneseq
        %v1675 = vshrl.u32 %v1674, 7
        %v1676 = vsub.s32 7, %v1675
        %v1677 = vrot.slane %v320, %v1676
        %v1678 = vlaneseq
        %v1679 = vshrl.u32 %v1678, 7
        %v1680 = vsub.s32 0, %v1679
        %v1681 = vrot.slane %v321, %v1680
        %v1682 = vlaneseq
        %v1683 = vshrl.u32 %v1682, 7
        %v1684 = vsub.s32 1, %v1683
        %v1685 = vrot.slane %v321, %v1684
        %v1686 = vlaneseq
        %v1687 = vshrl.u32 %v1686, 7
        %v1688 = vsub.s32 2, %v1687
        %v1689 = vrot.slane %v321, %v1688
        %v1690 = vlaneseq
        %v1691 = vshrl.u32 %v1690, 7
        %v1692 = vsub.s32 3, %v1691
        %v1693 = vrot.slane %v321, %v1692
        %v1714 = vsel %vm1531, %v1617, 0.0
        %v1715 = vsel %vm1532, %v1621, 0.0
        %v1716 = vsel %vm1533, %v1625, 0.0
        %v1717 = vsel %vm1534, %v1629, 0.0
        %v1718 = vsel %vm1535, %v1633, 0.0
        %v1719 = vsel %vm1536, %v1637, 0.0
        %v1720 = vsel %vm1537, %v1641, 0.0
        %v1721 = vsel %vm1538, %v1645, 0.0
        %v1722 = vsel %vm1539, %v1649, 0.0
        %v1723 = vsel %vm1540, %v1653, 0.0
        %v1724 = vsel %vm1541, %v1657, 0.0
        %v1725 = vsel %vm1542, %v1661, 0.0
        %v1726 = vsel %vm1543, %v1665, 0.0
        %v1727 = vsel %vm1544, %v1669, 0.0
        %v1728 = vsel %vm1545, %v1673, 0.0
        %v1729 = vsel %vm1546, %v1677, 0.0
        %v1730 = vsel %vm1547, %v1681, 0.0
        %v1731 = vsel %vm1548, %v1685, 0.0
        %v1732 = vsel %vm1549, %v1689, 0.0
        %v1733 = vsel %vm1550, %v1693, 0.0
        %v1734 = vsel %vm1551, %v1617, 0.0
        %v1735 = vsel %vm1552, %v1621, 0.0
        %v1736 = vsel %vm1553, %v1625, 0.0
        %v1737 = vsel %vm1554, %v1629, 0.0
        %v1738 = vsel %vm1555, %v1633, 0.0
        %v1739 = vsel %vm1556, %v1637, 0.0
        %v1740 = vsel %vm1557, %v1641, 0.0
        %v1741 = vsel %vm1558, %v1645, 0.0
        %v1742 = vsel %vm1559, %v1649, 0.0
        %v1743 = vsel %vm1560, %v1653, 0.0
        %v1744 = vsel %vm1561, %v1657, 0.0
        %v1745 = vsel %vm1562, %v1661, 0.0
        %v1746 = vsel %vm1563, %v1665, 0.0
        %v1747 = vsel %vm1564, %v1669, 0.0
        %v1748 = vsel %vm1565, %v1673, 0.0
        %v1749 = vsel %vm1566, %v1677, 0.0
        %v1750 = vsel %vm1567, %v1681, 0.0
        %v1751 = vsel %vm1568, %v1685, 0.0
        %v1752 = vsel %vm1569, %v1689, 0.0
        %v1753 = vsel %vm1570, %v1693, 0.0
        %v1754 = vsel %vm1571, %v1617, 0.0
        %v1755 = vsel %vm1572, %v1621, 0.0
        %v1756 = vsel %vm1573, %v1625, 0.0
        %v1757 = vsel %vm1574, %v1629, 0.0
        %v1758 = vsel %vm1575, %v1633, 0.0
        %v1759 = vsel %vm1576, %v1637, 0.0
        %v1760 = vsel %vm1577, %v1641, 0.0
        %v1761 = vsel %vm1578, %v1645, 0.0
        %v1762 = vsel %vm1579, %v1649, 0.0
        %v1763 = vsel %vm1580, %v1653, 0.0
        %v1764 = vsel %vm1581, %v1657, 0.0
        %v1765 = vsel %vm1582, %v1661, 0.0
        %v1766 = vsel %vm1583, %v1665, 0.0
        %v1767 = vsel %vm1584, %v1669, 0.0
        %v1768 = vsel %vm1585, %v1673, 0.0
        %v1769 = vsel %vm1586, %v1677, 0.0
        %v1770 = vsel %vm1587, %v1681, 0.0
        %v1771 = vsel %vm1588, %v1685, 0.0
        %v1772 = vsel %vm1589, %v1689, 0.0
        %v1773 = vsel %vm1590, %v1693, 0.0
        %v1774 = vsel %vm1591, %v1617, 0.0
        %v1775 = vsel %vm1592, %v1621, 0.0
        %v1776 = vsel %vm1593, %v1625, 0.0
        %v1777 = vsel %vm1594, %v1629, 0.0
        %v1778 = vsel %vm1595, %v1633, 0.0
        %v1779 = vsel %vm1596, %v1637, 0.0
        %v1780 = vsel %vm1597, %v1641, 0.0
        %v1781 = vsel %vm1598, %v1645, 0.0
        %v1782 = vsel %vm1599, %v1649, 0.0
        %v1783 = vsel %vm1600, %v1653, 0.0
        %v1784 = vsel %vm1601, %v1657, 0.0
        %v1785 = vsel %vm1602, %v1661, 0.0
        %v1786 = vsel %vm1603, %v1665, 0.0
        %v1787 = vsel %vm1604, %v1669, 0.0
        %v1788 = vsel %vm1605, %v1673, 0.0
        %v1789 = vsel %vm1606, %v1677, 0.0
        %v1790 = vsel %vm1607, %v1681, 0.0
        %v1791 = vsel %vm1608, %v1685, 0.0
        %v1792 = vsel %vm1609, %v1689, 0.0
        %v1793 = vsel %vm1610, %v1693, 0.0
        %v1794 = vadd.f32 %v1368, %v1714
        %v1795 = vadd.f32 %v1369, %v1715
        %v1796 = vadd.f32 %v1370, %v1716
        %v1797 = vadd.f32 %v1371, %v1717
        %v1798 = vadd.f32 %v1372, %v1718
        %v1799 = vadd.f32 %v1373, %v1719
        %v1800 = vadd.f32 %v1374, %v1720
        %v1801 = vadd.f32 %v1375, %v1721
        %v1802 = vadd.f32 %v1376, %v1722
        %v1803 = vadd.f32 %v1377, %v1723
        %v1804 = vadd.f32 %v1378, %v1724
        %v1805 = vadd.f32 %v1379, %v1725
        %v1806 = vadd.f32 %v1380, %v1726
        %v1807 = vadd.f32 %v1381, %v1727
        %v1808 = vadd.f32 %v1382, %v1728
        %v1809 = vadd.f32 %v1383, %v1729
        %v1810 = vadd.f32 %v1384, %v1730
        %v1811 = vadd.f32 %v1385, %v1731
        %v1812 = vadd.f32 %v1386, %v1732
        %v1813 = vadd.f32 %v1387, %v1733
        %v1814 = vadd.f32 %v1388, %v1734
        %v1815 = vadd.f32 %v1389, %v1735
        %v1816 = vadd.f32 %v1390, %v1736
        %v1817 = vadd.f32 %v1391, %v1737
        %v1818 = vadd.f32 %v1392, %v1738
        %v1819 = vadd.f32 %v1393, %v1739
        %v1820 = vadd.f32 %v1394, %v1740
        %v1821 = vadd.f32 %v1395, %v1741
        %v1822 = vadd.f32 %v1396, %v1742
        %v1823 = vadd.f32 %v1397, %v1743
        %v1824 = vadd.f32 %v1398, %v1744
        %v1825 = vadd.f32 %v1399, %v1745
        %v1826 = vadd.f32 %v1400, %v1746
        %v1827 = vadd.f32 %v1401, %v1747
        %v1828 = vadd.f32 %v1402, %v1748
        %v1829 = vadd.f32 %v1403, %v1749
        %v1830 = vadd.f32 %v1404, %v1750
        %v1831 = vadd.f32 %v1405, %v1751
        %v1832 = vadd.f32 %v1406, %v1752
        %v1833 = vadd.f32 %v1407, %v1753
        %v1834 = vadd.f32 %v1408, %v1754
        %v1835 = vadd.f32 %v1409, %v1755
        %v1836 = vadd.f32 %v1410, %v1756
        %v1837 = vadd.f32 %v1411, %v1757
        %v1838 = vadd.f32 %v1412, %v1758
        %v1839 = vadd.f32 %v1413, %v1759
        %v1840 = vadd.f32 %v1414, %v1760
        %v1841 = vadd.f32 %v1415, %v1761
        %v1842 = vadd.f32 %v1416, %v1762
        %v1843 = vadd.f32 %v1417, %v1763
        %v1844 = vadd.f32 %v1418, %v1764
        %v1845 = vadd.f32 %v1419, %v1765
        %v1846 = vadd.f32 %v1420, %v1766
        %v1847 = vadd.f32 %v1421, %v1767
        %v1848 = vadd.f32 %v1422, %v1768
        %v1849 = vadd.f32 %v1423, %v1769
        %v1850 = vadd.f32 %v1424, %v1770
        %v1851 = vadd.f32 %v1425, %v1771
        %v1852 = vadd.f32 %v1426, %v1772
        %v1853 = vadd.f32 %v1427, %v1773
        %v1854 = vadd.f32 %v1428, %v1774
        %v1855 = vadd.f32 %v1429, %v1775
        %v1856 = vadd.f32 %v1430, %v1776
        %v1857 = vadd.f32 %v1431, %v1777
        %v1858 = vadd.f32 %v1432, %v1778
        %v1859 = vadd.f32 %v1433, %v1779
        %v1860 = vadd.f32 %v1434, %v1780
        %v1861 = vadd.f32 %v1435, %v1781
        %v1862 = vadd.f32 %v1436, %v1782
        %v1863 = vadd.f32 %v1437, %v1783
        %v1864 = vadd.f32 %v1438, %v1784
        %v1865 = vadd.f32 %v1439, %v1785
        %v1866 = vadd.f32 %v1440, %v1786
        %v1867 = vadd.f32 %v1441, %v1787
        %v1868 = vadd.f32 %v1442, %v1788
        %v1869 = vadd.f32 %v1443, %v1789
        %v1870 = vadd.f32 %v1444, %v1790
        %v1871 = vadd.f32 %v1445, %v1791
        %v1872 = vadd.f32 %v1446, %v1792
        %v1873 = vadd.f32 %v1447, %v1793
        %vm1874 = vcmask 261120
        %v1876 = vsel %vm1874, %v246, 0
        %v1879 = vsel %vm1874, %v247, 0
        %v1882 = vsel %vm1874, %v248, 0
        %v1885 = vsel %vm1874, %v249, 0
        %1887 = vmatprep.subr.mxu0 0.0
        %1888 = vmatpush1.msra.mxu0 0.0
        %1889 = vmatprep.subr.mxu0 0.0
        %1890 = vmatpush1.msra.mxu0 0.0
        %1891 = vmatprep.subr.mxu0 0.0
        %1892 = vmatpush1.msra.mxu0 0.0
        %1893 = vmatprep.subr.mxu0 0.0
        %1894 = vmatpush1.msra.mxu0 0.0
        %1895 = vmatprep.subr.mxu0 0.0
        %1896 = vmatpush1.msra.mxu0 0.0
        %1897 = vmatprep.subr.mxu0 0.0
        %1898 = vmatpush1.msra.mxu0 0.0
        %1899 = vmatprep.subr.mxu0 0.0
        %1900 = vmatpush1.msra.mxu0 0.0
        %1901 = vmatprep.subr.mxu0 0.0
        %1902 = vmatpush1.msra.mxu0 0.0
        %1903 = vmatprep.subr.mxu0 0.0
        %1904 = vmatpush1.msra.mxu0 0.0
        %1905 = vmatprep.subr.mxu0 0.0
        %1906 = vmatpush1.msra.mxu0 0.0
        %1907 = vmatprep.subr.mxu0 0.0
        %1908 = vmatpush1.msra.mxu0 0.0
        %1909 = vmatprep.subr.mxu0 0.0
        %1910 = vmatpush1.msra.mxu0 0.0
        %1911 = vmatprep.subr.mxu0 %v1855
        %1912 = vmatpush1.msra.mxu0 %v1854
        %1913 = vmatprep.subr.mxu0 %v1835
        %1914 = vmatpush1.msra.mxu0 %v1834
        %1915 = vmatprep.subr.mxu0 %v1815
        %1916 = vmatpush1.msra.mxu0 %v1814
        %1917 = vmatprep.subr.mxu0 %v1795
        %1918 = vmatpush1.msra.mxu0 %v1794
        %1919 = vmatprep.subr.mxu0 0.0
        %1920 = vmatpush2.msra.mxu0 0.0
        %1921 = vmatprep.subr.mxu0 0.0
        %1922 = vmatpush2.msra.mxu0 0.0
        %1923 = vmatprep.subr.mxu0 0.0
        %1924 = vmatpush2.msra.mxu0 0.0
        %1925 = vmatprep.subr.mxu0 0.0
        %1926 = vmatpush2.msra.mxu0 0.0
        %1927 = vmatprep.subr.mxu0 0.0
        %1928 = vmatpush2.msra.mxu0 0.0
        %1929 = vmatprep.subr.mxu0 0.0
        %1930 = vmatpush2.msra.mxu0 0.0
        %1931 = vmatprep.subr.mxu0 0.0
        %1932 = vmatpush2.msra.mxu0 0.0
        %1933 = vmatprep.subr.mxu0 0.0
        %1934 = vmatpush2.msra.mxu0 0.0
        %1935 = vmatprep.subr.mxu0 0.0
        %1936 = vmatpush2.msra.mxu0 0.0
        %1937 = vmatprep.subr.mxu0 0.0
        %1938 = vmatpush2.msra.mxu0 0.0
        %1939 = vmatprep.subr.mxu0 0.0
        %1940 = vmatpush2.msra.mxu0 0.0
        %1941 = vmatprep.subr.mxu0 0.0
        %1942 = vmatpush2.msra.mxu0 0.0
        %1943 = vmatprep.subr.mxu0 0.0
        %1944 = vmatpush2.msra.mxu0 0.0
        %1945 = vmatprep.subr.mxu0 0.0
        %1946 = vmatpush2.msra.mxu0 0.0
        %1947 = vmatprep.subr.mxu0 0.0
        %1948 = vmatpush2.msra.mxu0 0.0
        %1949 = vmatprep.subr.mxu0 0.0
        %1950 = vmatpush2.msra.mxu0 0.0
        %1951 = vmatprep.mubr.f32.mxu0 0.0
        %1952 = vmatmul.mubr.f32.gmra.mxu0 %v1876
        %v1953 = vpop.f32.mrf.mxu0
        %v1954 = vadd.f32 0.0, %v1953
        %v1955 = vpop.f32.mrf.mxu0
        %v1956 = vadd.f32 0.0, %v1955
        %1957 = vmatprep.mubr.f32.mxu0 0.0
        %1958 = vmatmul.mubr.f32.gmra.mxu0 %v1879
        %v1959 = vpop.f32.mrf.mxu0
        %v1960 = vadd.f32 0.0, %v1959
        %v1961 = vpop.f32.mrf.mxu0
        %v1962 = vadd.f32 0.0, %v1961
        %1963 = vmatprep.mubr.f32.mxu0 0.0
        %1964 = vmatmul.mubr.f32.gmra.mxu0 %v1882
        %v1965 = vpop.f32.mrf.mxu0
        %v1966 = vadd.f32 0.0, %v1965
        %v1967 = vpop.f32.mrf.mxu0
        %v1968 = vadd.f32 0.0, %v1967
        %1969 = vmatprep.mubr.f32.mxu0 0.0
        %1970 = vmatmul.mubr.f32.gmra.mxu0 %v1885
        %v1971 = vpop.f32.mrf.mxu0
        %v1972 = vadd.f32 0.0, %v1971
        %v1973 = vpop.f32.mrf.mxu0
        %v1974 = vadd.f32 0.0, %v1973
        %1975 = vdwg.mxu0
        %1976 = vmatprep.subr.mxu0 0.0
        %1977 = vmatpush1.msra.mxu0 0.0
        %1978 = vmatprep.subr.mxu0 0.0
        %1979 = vmatpush1.msra.mxu0 0.0
        %1980 = vmatprep.subr.mxu0 0.0
        %1981 = vmatpush1.msra.mxu0 0.0
        %1982 = vmatprep.subr.mxu0 0.0
        %1983 = vmatpush1.msra.mxu0 0.0
        %1984 = vmatprep.subr.mxu0 0.0
        %1985 = vmatpush1.msra.mxu0 0.0
        %1986 = vmatprep.subr.mxu0 0.0
        %1987 = vmatpush1.msra.mxu0 0.0
        %1988 = vmatprep.subr.mxu0 0.0
        %1989 = vmatpush1.msra.mxu0 0.0
        %1990 = vmatprep.subr.mxu0 0.0
        %1991 = vmatpush1.msra.mxu0 0.0
        %1992 = vmatprep.subr.mxu0 0.0
        %1993 = vmatpush1.msra.mxu0 0.0
        %1994 = vmatprep.subr.mxu0 0.0
        %1995 = vmatpush1.msra.mxu0 0.0
        %1996 = vmatprep.subr.mxu0 0.0
        %1997 = vmatpush1.msra.mxu0 0.0
        %1998 = vmatprep.subr.mxu0 0.0
        %1999 = vmatpush1.msra.mxu0 0.0
        %2000 = vmatprep.subr.mxu0 %v1857
        %2001 = vmatpush1.msra.mxu0 %v1856
        %2002 = vmatprep.subr.mxu0 %v1837
        %2003 = vmatpush1.msra.mxu0 %v1836
        %2004 = vmatprep.subr.mxu0 %v1817
        %2005 = vmatpush1.msra.mxu0 %v1816
        %2006 = vmatprep.subr.mxu0 %v1797
        %2007 = vmatpush1.msra.mxu0 %v1796
        %2008 = vmatprep.subr.mxu0 0.0
        %2009 = vmatpush2.msra.mxu0 0.0
        %2010 = vmatprep.subr.mxu0 0.0
        %2011 = vmatpush2.msra.mxu0 0.0
        %2012 = vmatprep.subr.mxu0 0.0
        %2013 = vmatpush2.msra.mxu0 0.0
        %2014 = vmatprep.subr.mxu0 0.0
        %2015 = vmatpush2.msra.mxu0 0.0
        %2016 = vmatprep.subr.mxu0 0.0
        %2017 = vmatpush2.msra.mxu0 0.0
        %2018 = vmatprep.subr.mxu0 0.0
        %2019 = vmatpush2.msra.mxu0 0.0
        %2020 = vmatprep.subr.mxu0 0.0
        %2021 = vmatpush2.msra.mxu0 0.0
        %2022 = vmatprep.subr.mxu0 0.0
        %2023 = vmatpush2.msra.mxu0 0.0
        %2024 = vmatprep.subr.mxu0 0.0
        %2025 = vmatpush2.msra.mxu0 0.0
        %2026 = vmatprep.subr.mxu0 0.0
        %2027 = vmatpush2.msra.mxu0 0.0
        %2028 = vmatprep.subr.mxu0 0.0
        %2029 = vmatpush2.msra.mxu0 0.0
        %2030 = vmatprep.subr.mxu0 0.0
        %2031 = vmatpush2.msra.mxu0 0.0
        %2032 = vmatprep.subr.mxu0 0.0
        %2033 = vmatpush2.msra.mxu0 0.0
        %2034 = vmatprep.subr.mxu0 0.0
        %2035 = vmatpush2.msra.mxu0 0.0
        %2036 = vmatprep.subr.mxu0 0.0
        %2037 = vmatpush2.msra.mxu0 0.0
        %2038 = vmatprep.subr.mxu0 0.0
        %2039 = vmatpush2.msra.mxu0 0.0
        %2040 = vmatprep.mubr.f32.mxu0 0.0
        %2041 = vmatmul.mubr.f32.gmra.mxu0 %v1876
        %v2042 = vpop.f32.mrf.mxu0
        %v2043 = vadd.f32 0.0, %v2042
        %v2044 = vpop.f32.mrf.mxu0
        %v2045 = vadd.f32 0.0, %v2044
        %2046 = vmatprep.mubr.f32.mxu0 0.0
        %2047 = vmatmul.mubr.f32.gmra.mxu0 %v1879
        %v2048 = vpop.f32.mrf.mxu0
        %v2049 = vadd.f32 0.0, %v2048
        %v2050 = vpop.f32.mrf.mxu0
        %v2051 = vadd.f32 0.0, %v2050
        %2052 = vmatprep.mubr.f32.mxu0 0.0
        %2053 = vmatmul.mubr.f32.gmra.mxu0 %v1882
        %v2054 = vpop.f32.mrf.mxu0
        %v2055 = vadd.f32 0.0, %v2054
        %v2056 = vpop.f32.mrf.mxu0
        %v2057 = vadd.f32 0.0, %v2056
        %2058 = vmatprep.mubr.f32.mxu0 0.0
        %2059 = vmatmul.mubr.f32.gmra.mxu0 %v1885
        %v2060 = vpop.f32.mrf.mxu0
        %v2061 = vadd.f32 0.0, %v2060
        %v2062 = vpop.f32.mrf.mxu0
        %v2063 = vadd.f32 0.0, %v2062
        %2064 = vdwg.mxu0
        %2065 = vmatprep.subr.mxu0 0.0
        %2066 = vmatpush1.msra.mxu0 0.0
        %2067 = vmatprep.subr.mxu0 0.0
        %2068 = vmatpush1.msra.mxu0 0.0
        %2069 = vmatprep.subr.mxu0 0.0
        %2070 = vmatpush1.msra.mxu0 0.0
        %2071 = vmatprep.subr.mxu0 0.0
        %2072 = vmatpush1.msra.mxu0 0.0
        %2073 = vmatprep.subr.mxu0 0.0
        %2074 = vmatpush1.msra.mxu0 0.0
        %2075 = vmatprep.subr.mxu0 0.0
        %2076 = vmatpush1.msra.mxu0 0.0
        %2077 = vmatprep.subr.mxu0 0.0
        %2078 = vmatpush1.msra.mxu0 0.0
        %2079 = vmatprep.subr.mxu0 0.0
        %2080 = vmatpush1.msra.mxu0 0.0
        %2081 = vmatprep.subr.mxu0 0.0
        %2082 = vmatpush1.msra.mxu0 0.0
        %2083 = vmatprep.subr.mxu0 0.0
        %2084 = vmatpush1.msra.mxu0 0.0
        %2085 = vmatprep.subr.mxu0 0.0
        %2086 = vmatpush1.msra.mxu0 0.0
        %2087 = vmatprep.subr.mxu0 0.0
        %2088 = vmatpush1.msra.mxu0 0.0
        %2089 = vmatprep.subr.mxu0 %v1859
        %2090 = vmatpush1.msra.mxu0 %v1858
        %2091 = vmatprep.subr.mxu0 %v1839
        %2092 = vmatpush1.msra.mxu0 %v1838
        %2093 = vmatprep.subr.mxu0 %v1819
        %2094 = vmatpush1.msra.mxu0 %v1818
        %2095 = vmatprep.subr.mxu0 %v1799
        %2096 = vmatpush1.msra.mxu0 %v1798
        %2097 = vmatprep.subr.mxu0 0.0
        %2098 = vmatpush2.msra.mxu0 0.0
        %2099 = vmatprep.subr.mxu0 0.0
        %2100 = vmatpush2.msra.mxu0 0.0
        %2101 = vmatprep.subr.mxu0 0.0
        %2102 = vmatpush2.msra.mxu0 0.0
        %2103 = vmatprep.subr.mxu0 0.0
        %2104 = vmatpush2.msra.mxu0 0.0
        %2105 = vmatprep.subr.mxu0 0.0
        %2106 = vmatpush2.msra.mxu0 0.0
        %2107 = vmatprep.subr.mxu0 0.0
        %2108 = vmatpush2.msra.mxu0 0.0
        %2109 = vmatprep.subr.mxu0 0.0
        %2110 = vmatpush2.msra.mxu0 0.0
        %2111 = vmatprep.subr.mxu0 0.0
        %2112 = vmatpush2.msra.mxu0 0.0
        %2113 = vmatprep.subr.mxu0 0.0
        %2114 = vmatpush2.msra.mxu0 0.0
        %2115 = vmatprep.subr.mxu0 0.0
        %2116 = vmatpush2.msra.mxu0 0.0
        %2117 = vmatprep.subr.mxu0 0.0
        %2118 = vmatpush2.msra.mxu0 0.0
        %2119 = vmatprep.subr.mxu0 0.0
        %2120 = vmatpush2.msra.mxu0 0.0
        %2121 = vmatprep.subr.mxu0 0.0
        %2122 = vmatpush2.msra.mxu0 0.0
        %2123 = vmatprep.subr.mxu0 0.0
        %2124 = vmatpush2.msra.mxu0 0.0
        %2125 = vmatprep.subr.mxu0 0.0
        %2126 = vmatpush2.msra.mxu0 0.0
        %2127 = vmatprep.subr.mxu0 0.0
        %2128 = vmatpush2.msra.mxu0 0.0
        %2129 = vmatprep.mubr.f32.mxu0 0.0
        %2130 = vmatmul.mubr.f32.gmra.mxu0 %v1876
        %v2131 = vpop.f32.mrf.mxu0
        %v2132 = vadd.f32 0.0, %v2131
        %v2133 = vpop.f32.mrf.mxu0
        %v2134 = vadd.f32 0.0, %v2133
        %2135 = vmatprep.mubr.f32.mxu0 0.0
        %2136 = vmatmul.mubr.f32.gmra.mxu0 %v1879
        %v2137 = vpop.f32.mrf.mxu0
        %v2138 = vadd.f32 0.0, %v2137
        %v2139 = vpop.f32.mrf.mxu0
        %v2140 = vadd.f32 0.0, %v2139
        %2141 = vmatprep.mubr.f32.mxu0 0.0
        %2142 = vmatmul.mubr.f32.gmra.mxu0 %v1882
        %v2143 = vpop.f32.mrf.mxu0
        %v2144 = vadd.f32 0.0, %v2143
        %v2145 = vpop.f32.mrf.mxu0
        %v2146 = vadd.f32 0.0, %v2145
        %2147 = vmatprep.mubr.f32.mxu0 0.0
        %2148 = vmatmul.mubr.f32.gmra.mxu0 %v1885
        %v2149 = vpop.f32.mrf.mxu0
        %v2150 = vadd.f32 0.0, %v2149
        %v2151 = vpop.f32.mrf.mxu0
        %v2152 = vadd.f32 0.0, %v2151
        %2153 = vdwg.mxu0
        %2154 = vmatprep.subr.mxu0 0.0
        %2155 = vmatpush1.msra.mxu0 0.0
        %2156 = vmatprep.subr.mxu0 0.0
        %2157 = vmatpush1.msra.mxu0 0.0
        %2158 = vmatprep.subr.mxu0 0.0
        %2159 = vmatpush1.msra.mxu0 0.0
        %2160 = vmatprep.subr.mxu0 0.0
        %2161 = vmatpush1.msra.mxu0 0.0
        %2162 = vmatprep.subr.mxu0 0.0
        %2163 = vmatpush1.msra.mxu0 0.0
        %2164 = vmatprep.subr.mxu0 0.0
        %2165 = vmatpush1.msra.mxu0 0.0
        %2166 = vmatprep.subr.mxu0 0.0
        %2167 = vmatpush1.msra.mxu0 0.0
        %2168 = vmatprep.subr.mxu0 0.0
        %2169 = vmatpush1.msra.mxu0 0.0
        %2170 = vmatprep.subr.mxu0 0.0
        %2171 = vmatpush1.msra.mxu0 0.0
        %2172 = vmatprep.subr.mxu0 0.0
        %2173 = vmatpush1.msra.mxu0 0.0
        %2174 = vmatprep.subr.mxu0 0.0
        %2175 = vmatpush1.msra.mxu0 0.0
        %2176 = vmatprep.subr.mxu0 0.0
        %2177 = vmatpush1.msra.mxu0 0.0
        %2178 = vmatprep.subr.mxu0 %v1861
        %2179 = vmatpush1.msra.mxu0 %v1860
        %2180 = vmatprep.subr.mxu0 %v1841
        %2181 = vmatpush1.msra.mxu0 %v1840
        %2182 = vmatprep.subr.mxu0 %v1821
        %2183 = vmatpush1.msra.mxu0 %v1820
        %2184 = vmatprep.subr.mxu0 %v1801
        %2185 = vmatpush1.msra.mxu0 %v1800
        %2186 = vmatprep.subr.mxu0 0.0
        %2187 = vmatpush2.msra.mxu0 0.0
        %2188 = vmatprep.subr.mxu0 0.0
        %2189 = vmatpush2.msra.mxu0 0.0
        %2190 = vmatprep.subr.mxu0 0.0
        %2191 = vmatpush2.msra.mxu0 0.0
        %2192 = vmatprep.subr.mxu0 0.0
        %2193 = vmatpush2.msra.mxu0 0.0
        %2194 = vmatprep.subr.mxu0 0.0
        %2195 = vmatpush2.msra.mxu0 0.0
        %2196 = vmatprep.subr.mxu0 0.0
        %2197 = vmatpush2.msra.mxu0 0.0
        %2198 = vmatprep.subr.mxu0 0.0
        %2199 = vmatpush2.msra.mxu0 0.0
        %2200 = vmatprep.subr.mxu0 0.0
        %2201 = vmatpush2.msra.mxu0 0.0
        %2202 = vmatprep.subr.mxu0 0.0
        %2203 = vmatpush2.msra.mxu0 0.0
        %2204 = vmatprep.subr.mxu0 0.0
        %2205 = vmatpush2.msra.mxu0 0.0
        %2206 = vmatprep.subr.mxu0 0.0
        %2207 = vmatpush2.msra.mxu0 0.0
        %2208 = vmatprep.subr.mxu0 0.0
        %2209 = vmatpush2.msra.mxu0 0.0
        %2210 = vmatprep.subr.mxu0 0.0
        %2211 = vmatpush2.msra.mxu0 0.0
        %2212 = vmatprep.subr.mxu0 0.0
        %2213 = vmatpush2.msra.mxu0 0.0
        %2214 = vmatprep.subr.mxu0 0.0
        %2215 = vmatpush2.msra.mxu0 0.0
        %2216 = vmatprep.subr.mxu0 0.0
        %2217 = vmatpush2.msra.mxu0 0.0
        %2218 = vmatprep.mubr.f32.mxu0 0.0
        %2219 = vmatmul.mubr.f32.gmra.mxu0 %v1876
        %v2220 = vpop.f32.mrf.mxu0
        %v2221 = vadd.f32 0.0, %v2220
        %v2222 = vpop.f32.mrf.mxu0
        %v2223 = vadd.f32 0.0, %v2222
        %2224 = vmatprep.mubr.f32.mxu0 0.0
        %2225 = vmatmul.mubr.f32.gmra.mxu0 %v1879
        %v2226 = vpop.f32.mrf.mxu0
        %v2227 = vadd.f32 0.0, %v2226
        %v2228 = vpop.f32.mrf.mxu0
        %v2229 = vadd.f32 0.0, %v2228
        %2230 = vmatprep.mubr.f32.mxu0 0.0
        %2231 = vmatmul.mubr.f32.gmra.mxu0 %v1882
        %v2232 = vpop.f32.mrf.mxu0
        %v2233 = vadd.f32 0.0, %v2232
        %v2234 = vpop.f32.mrf.mxu0
        %v2235 = vadd.f32 0.0, %v2234
        %2236 = vmatprep.mubr.f32.mxu0 0.0
        %2237 = vmatmul.mubr.f32.gmra.mxu0 %v1885
        %v2238 = vpop.f32.mrf.mxu0
        %v2239 = vadd.f32 0.0, %v2238
        %v2240 = vpop.f32.mrf.mxu0
        %v2241 = vadd.f32 0.0, %v2240
        %2242 = vdwg.mxu0
        %2243 = vmatprep.subr.mxu0 0.0
        %2244 = vmatpush1.msra.mxu0 0.0
        %2245 = vmatprep.subr.mxu0 0.0
        %2246 = vmatpush1.msra.mxu0 0.0
        %2247 = vmatprep.subr.mxu0 0.0
        %2248 = vmatpush1.msra.mxu0 0.0
        %2249 = vmatprep.subr.mxu0 0.0
        %2250 = vmatpush1.msra.mxu0 0.0
        %2251 = vmatprep.subr.mxu0 0.0
        %2252 = vmatpush1.msra.mxu0 0.0
        %2253 = vmatprep.subr.mxu0 0.0
        %2254 = vmatpush1.msra.mxu0 0.0
        %2255 = vmatprep.subr.mxu0 0.0
        %2256 = vmatpush1.msra.mxu0 0.0
        %2257 = vmatprep.subr.mxu0 0.0
        %2258 = vmatpush1.msra.mxu0 0.0
        %2259 = vmatprep.subr.mxu0 0.0
        %2260 = vmatpush1.msra.mxu0 0.0
        %2261 = vmatprep.subr.mxu0 0.0
        %2262 = vmatpush1.msra.mxu0 0.0
        %2263 = vmatprep.subr.mxu0 0.0
        %2264 = vmatpush1.msra.mxu0 0.0
        %2265 = vmatprep.subr.mxu0 0.0
        %2266 = vmatpush1.msra.mxu0 0.0
        %2267 = vmatprep.subr.mxu0 %v1863
        %2268 = vmatpush1.msra.mxu0 %v1862
        %2269 = vmatprep.subr.mxu0 %v1843
        %2270 = vmatpush1.msra.mxu0 %v1842
        %2271 = vmatprep.subr.mxu0 %v1823
        %2272 = vmatpush1.msra.mxu0 %v1822
        %2273 = vmatprep.subr.mxu0 %v1803
        %2274 = vmatpush1.msra.mxu0 %v1802
        %2275 = vmatprep.subr.mxu0 0.0
        %2276 = vmatpush2.msra.mxu0 0.0
        %2277 = vmatprep.subr.mxu0 0.0
        %2278 = vmatpush2.msra.mxu0 0.0
        %2279 = vmatprep.subr.mxu0 0.0
        %2280 = vmatpush2.msra.mxu0 0.0
        %2281 = vmatprep.subr.mxu0 0.0
        %2282 = vmatpush2.msra.mxu0 0.0
        %2283 = vmatprep.subr.mxu0 0.0
        %2284 = vmatpush2.msra.mxu0 0.0
        %2285 = vmatprep.subr.mxu0 0.0
        %2286 = vmatpush2.msra.mxu0 0.0
        %2287 = vmatprep.subr.mxu0 0.0
        %2288 = vmatpush2.msra.mxu0 0.0
        %2289 = vmatprep.subr.mxu0 0.0
        %2290 = vmatpush2.msra.mxu0 0.0
        %2291 = vmatprep.subr.mxu0 0.0
        %2292 = vmatpush2.msra.mxu0 0.0
        %2293 = vmatprep.subr.mxu0 0.0
        %2294 = vmatpush2.msra.mxu0 0.0
        %2295 = vmatprep.subr.mxu0 0.0
        %2296 = vmatpush2.msra.mxu0 0.0
        %2297 = vmatprep.subr.mxu0 0.0
        %2298 = vmatpush2.msra.mxu0 0.0
        %2299 = vmatprep.subr.mxu0 0.0
        %2300 = vmatpush2.msra.mxu0 0.0
        %2301 = vmatprep.subr.mxu0 0.0
        %2302 = vmatpush2.msra.mxu0 0.0
        %2303 = vmatprep.subr.mxu0 0.0
        %2304 = vmatpush2.msra.mxu0 0.0
        %2305 = vmatprep.subr.mxu0 0.0
        %2306 = vmatpush2.msra.mxu0 0.0
        %2307 = vmatprep.mubr.f32.mxu0 0.0
        %2308 = vmatmul.mubr.f32.gmra.mxu0 %v1876
        %v2309 = vpop.f32.mrf.mxu0
        %v2310 = vadd.f32 0.0, %v2309
        %v2311 = vpop.f32.mrf.mxu0
        %v2312 = vadd.f32 0.0, %v2311
        %2313 = vmatprep.mubr.f32.mxu0 0.0
        %2314 = vmatmul.mubr.f32.gmra.mxu0 %v1879
        %v2315 = vpop.f32.mrf.mxu0
        %v2316 = vadd.f32 0.0, %v2315
        %v2317 = vpop.f32.mrf.mxu0
        %v2318 = vadd.f32 0.0, %v2317
        %2319 = vmatprep.mubr.f32.mxu0 0.0
        %2320 = vmatmul.mubr.f32.gmra.mxu0 %v1882
        %v2321 = vpop.f32.mrf.mxu0
        %v2322 = vadd.f32 0.0, %v2321
        %v2323 = vpop.f32.mrf.mxu0
        %v2324 = vadd.f32 0.0, %v2323
        %2325 = vmatprep.mubr.f32.mxu0 0.0
        %2326 = vmatmul.mubr.f32.gmra.mxu0 %v1885
        %v2327 = vpop.f32.mrf.mxu0
        %v2328 = vadd.f32 0.0, %v2327
        %v2329 = vpop.f32.mrf.mxu0
        %v2330 = vadd.f32 0.0, %v2329
        %2331 = vdwg.mxu0
        %2332 = vmatprep.subr.mxu0 0.0
        %2333 = vmatpush1.msra.mxu0 0.0
        %2334 = vmatprep.subr.mxu0 0.0
        %2335 = vmatpush1.msra.mxu0 0.0
        %2336 = vmatprep.subr.mxu0 0.0
        %2337 = vmatpush1.msra.mxu0 0.0
        %2338 = vmatprep.subr.mxu0 0.0
        %2339 = vmatpush1.msra.mxu0 0.0
        %2340 = vmatprep.subr.mxu0 0.0
        %2341 = vmatpush1.msra.mxu0 0.0
        %2342 = vmatprep.subr.mxu0 0.0
        %2343 = vmatpush1.msra.mxu0 0.0
        %2344 = vmatprep.subr.mxu0 0.0
        %2345 = vmatpush1.msra.mxu0 0.0
        %2346 = vmatprep.subr.mxu0 0.0
        %2347 = vmatpush1.msra.mxu0 0.0
        %2348 = vmatprep.subr.mxu0 0.0
        %2349 = vmatpush1.msra.mxu0 0.0
        %2350 = vmatprep.subr.mxu0 0.0
        %2351 = vmatpush1.msra.mxu0 0.0
        %2352 = vmatprep.subr.mxu0 0.0
        %2353 = vmatpush1.msra.mxu0 0.0
        %2354 = vmatprep.subr.mxu0 0.0
        %2355 = vmatpush1.msra.mxu0 0.0
        %2356 = vmatprep.subr.mxu0 %v1865
        %2357 = vmatpush1.msra.mxu0 %v1864
        %2358 = vmatprep.subr.mxu0 %v1845
        %2359 = vmatpush1.msra.mxu0 %v1844
        %2360 = vmatprep.subr.mxu0 %v1825
        %2361 = vmatpush1.msra.mxu0 %v1824
        %2362 = vmatprep.subr.mxu0 %v1805
        %2363 = vmatpush1.msra.mxu0 %v1804
        %2364 = vmatprep.subr.mxu0 0.0
        %2365 = vmatpush2.msra.mxu0 0.0
        %2366 = vmatprep.subr.mxu0 0.0
        %2367 = vmatpush2.msra.mxu0 0.0
        %2368 = vmatprep.subr.mxu0 0.0
        %2369 = vmatpush2.msra.mxu0 0.0
        %2370 = vmatprep.subr.mxu0 0.0
        %2371 = vmatpush2.msra.mxu0 0.0
        %2372 = vmatprep.subr.mxu0 0.0
        %2373 = vmatpush2.msra.mxu0 0.0
        %2374 = vmatprep.subr.mxu0 0.0
        %2375 = vmatpush2.msra.mxu0 0.0
        %2376 = vmatprep.subr.mxu0 0.0
        %2377 = vmatpush2.msra.mxu0 0.0
        %2378 = vmatprep.subr.mxu0 0.0
        %2379 = vmatpush2.msra.mxu0 0.0
        %2380 = vmatprep.subr.mxu0 0.0
        %2381 = vmatpush2.msra.mxu0 0.0
        %2382 = vmatprep.subr.mxu0 0.0
        %2383 = vmatpush2.msra.mxu0 0.0
        %2384 = vmatprep.subr.mxu0 0.0
        %2385 = vmatpush2.msra.mxu0 0.0
        %2386 = vmatprep.subr.mxu0 0.0
        %2387 = vmatpush2.msra.mxu0 0.0
        %2388 = vmatprep.subr.mxu0 0.0
        %2389 = vmatpush2.msra.mxu0 0.0
        %2390 = vmatprep.subr.mxu0 0.0
        %2391 = vmatpush2.msra.mxu0 0.0
        %2392 = vmatprep.subr.mxu0 0.0
        %2393 = vmatpush2.msra.mxu0 0.0
        %2394 = vmatprep.subr.mxu0 0.0
        %2395 = vmatpush2.msra.mxu0 0.0
        %2396 = vmatprep.mubr.f32.mxu0 0.0
        %2397 = vmatmul.mubr.f32.gmra.mxu0 %v1876
        %v2398 = vpop.f32.mrf.mxu0
        %v2399 = vadd.f32 0.0, %v2398
        %v2400 = vpop.f32.mrf.mxu0
        %v2401 = vadd.f32 0.0, %v2400
        %2402 = vmatprep.mubr.f32.mxu0 0.0
        %2403 = vmatmul.mubr.f32.gmra.mxu0 %v1879
        %v2404 = vpop.f32.mrf.mxu0
        %v2405 = vadd.f32 0.0, %v2404
        %v2406 = vpop.f32.mrf.mxu0
        %v2407 = vadd.f32 0.0, %v2406
        %2408 = vmatprep.mubr.f32.mxu0 0.0
        %2409 = vmatmul.mubr.f32.gmra.mxu0 %v1882
        %v2410 = vpop.f32.mrf.mxu0
        %v2411 = vadd.f32 0.0, %v2410
        %v2412 = vpop.f32.mrf.mxu0
        %v2413 = vadd.f32 0.0, %v2412
        %2414 = vmatprep.mubr.f32.mxu0 0.0
        %2415 = vmatmul.mubr.f32.gmra.mxu0 %v1885
        %v2416 = vpop.f32.mrf.mxu0
        %v2417 = vadd.f32 0.0, %v2416
        %v2418 = vpop.f32.mrf.mxu0
        %v2419 = vadd.f32 0.0, %v2418
        %2420 = vdwg.mxu0
        %2421 = vmatprep.subr.mxu0 0.0
        %2422 = vmatpush1.msra.mxu0 0.0
        %2423 = vmatprep.subr.mxu0 0.0
        %2424 = vmatpush1.msra.mxu0 0.0
        %2425 = vmatprep.subr.mxu0 0.0
        %2426 = vmatpush1.msra.mxu0 0.0
        %2427 = vmatprep.subr.mxu0 0.0
        %2428 = vmatpush1.msra.mxu0 0.0
        %2429 = vmatprep.subr.mxu0 0.0
        %2430 = vmatpush1.msra.mxu0 0.0
        %2431 = vmatprep.subr.mxu0 0.0
        %2432 = vmatpush1.msra.mxu0 0.0
        %2433 = vmatprep.subr.mxu0 0.0
        %2434 = vmatpush1.msra.mxu0 0.0
        %2435 = vmatprep.subr.mxu0 0.0
        %2436 = vmatpush1.msra.mxu0 0.0
        %2437 = vmatprep.subr.mxu0 0.0
        %2438 = vmatpush1.msra.mxu0 0.0
        %2439 = vmatprep.subr.mxu0 0.0
        %2440 = vmatpush1.msra.mxu0 0.0
        %2441 = vmatprep.subr.mxu0 0.0
        %2442 = vmatpush1.msra.mxu0 0.0
        %2443 = vmatprep.subr.mxu0 0.0
        %2444 = vmatpush1.msra.mxu0 0.0
        %2445 = vmatprep.subr.mxu0 %v1867
        %2446 = vmatpush1.msra.mxu0 %v1866
        %2447 = vmatprep.subr.mxu0 %v1847
        %2448 = vmatpush1.msra.mxu0 %v1846
        %2449 = vmatprep.subr.mxu0 %v1827
        %2450 = vmatpush1.msra.mxu0 %v1826
        %2451 = vmatprep.subr.mxu0 %v1807
        %2452 = vmatpush1.msra.mxu0 %v1806
        %2453 = vmatprep.subr.mxu0 0.0
        %2454 = vmatpush2.msra.mxu0 0.0
        %2455 = vmatprep.subr.mxu0 0.0
        %2456 = vmatpush2.msra.mxu0 0.0
        %2457 = vmatprep.subr.mxu0 0.0
        %2458 = vmatpush2.msra.mxu0 0.0
        %2459 = vmatprep.subr.mxu0 0.0
        %2460 = vmatpush2.msra.mxu0 0.0
        %2461 = vmatprep.subr.mxu0 0.0
        %2462 = vmatpush2.msra.mxu0 0.0
        %2463 = vmatprep.subr.mxu0 0.0
        %2464 = vmatpush2.msra.mxu0 0.0
        %2465 = vmatprep.subr.mxu0 0.0
        %2466 = vmatpush2.msra.mxu0 0.0
        %2467 = vmatprep.subr.mxu0 0.0
        %2468 = vmatpush2.msra.mxu0 0.0
        %2469 = vmatprep.subr.mxu0 0.0
        %2470 = vmatpush2.msra.mxu0 0.0
        %2471 = vmatprep.subr.mxu0 0.0
        %2472 = vmatpush2.msra.mxu0 0.0
        %2473 = vmatprep.subr.mxu0 0.0
        %2474 = vmatpush2.msra.mxu0 0.0
        %2475 = vmatprep.subr.mxu0 0.0
        %2476 = vmatpush2.msra.mxu0 0.0
        %2477 = vmatprep.subr.mxu0 0.0
        %2478 = vmatpush2.msra.mxu0 0.0
        %2479 = vmatprep.subr.mxu0 0.0
        %2480 = vmatpush2.msra.mxu0 0.0
        %2481 = vmatprep.subr.mxu0 0.0
        %2482 = vmatpush2.msra.mxu0 0.0
        %2483 = vmatprep.subr.mxu0 0.0
        %2484 = vmatpush2.msra.mxu0 0.0
        %2485 = vmatprep.mubr.f32.mxu0 0.0
        %2486 = vmatmul.mubr.f32.gmra.mxu0 %v1876
        %v2487 = vpop.f32.mrf.mxu0
        %v2488 = vadd.f32 0.0, %v2487
        %v2489 = vpop.f32.mrf.mxu0
        %v2490 = vadd.f32 0.0, %v2489
        %2491 = vmatprep.mubr.f32.mxu0 0.0
        %2492 = vmatmul.mubr.f32.gmra.mxu0 %v1879
        %v2493 = vpop.f32.mrf.mxu0
        %v2494 = vadd.f32 0.0, %v2493
        %v2495 = vpop.f32.mrf.mxu0
        %v2496 = vadd.f32 0.0, %v2495
        %2497 = vmatprep.mubr.f32.mxu0 0.0
        %2498 = vmatmul.mubr.f32.gmra.mxu0 %v1882
        %v2499 = vpop.f32.mrf.mxu0
        %v2500 = vadd.f32 0.0, %v2499
        %v2501 = vpop.f32.mrf.mxu0
        %v2502 = vadd.f32 0.0, %v2501
        %2503 = vmatprep.mubr.f32.mxu0 0.0
        %2504 = vmatmul.mubr.f32.gmra.mxu0 %v1885
        %v2505 = vpop.f32.mrf.mxu0
        %v2506 = vadd.f32 0.0, %v2505
        %v2507 = vpop.f32.mrf.mxu0
        %v2508 = vadd.f32 0.0, %v2507
        %2509 = vdwg.mxu0
        %2510 = vmatprep.subr.mxu0 0.0
        %2511 = vmatpush1.msra.mxu0 0.0
        %2512 = vmatprep.subr.mxu0 0.0
        %2513 = vmatpush1.msra.mxu0 0.0
        %2514 = vmatprep.subr.mxu0 0.0
        %2515 = vmatpush1.msra.mxu0 0.0
        %2516 = vmatprep.subr.mxu0 0.0
        %2517 = vmatpush1.msra.mxu0 0.0
        %2518 = vmatprep.subr.mxu0 0.0
        %2519 = vmatpush1.msra.mxu0 0.0
        %2520 = vmatprep.subr.mxu0 0.0
        %2521 = vmatpush1.msra.mxu0 0.0
        %2522 = vmatprep.subr.mxu0 0.0
        %2523 = vmatpush1.msra.mxu0 0.0
        %2524 = vmatprep.subr.mxu0 0.0
        %2525 = vmatpush1.msra.mxu0 0.0
        %2526 = vmatprep.subr.mxu0 0.0
        %2527 = vmatpush1.msra.mxu0 0.0
        %2528 = vmatprep.subr.mxu0 0.0
        %2529 = vmatpush1.msra.mxu0 0.0
        %2530 = vmatprep.subr.mxu0 0.0
        %2531 = vmatpush1.msra.mxu0 0.0
        %2532 = vmatprep.subr.mxu0 0.0
        %2533 = vmatpush1.msra.mxu0 0.0
        %2534 = vmatprep.subr.mxu0 %v1869
        %2535 = vmatpush1.msra.mxu0 %v1868
        %2536 = vmatprep.subr.mxu0 %v1849
        %2537 = vmatpush1.msra.mxu0 %v1848
        %2538 = vmatprep.subr.mxu0 %v1829
        %2539 = vmatpush1.msra.mxu0 %v1828
        %2540 = vmatprep.subr.mxu0 %v1809
        %2541 = vmatpush1.msra.mxu0 %v1808
        %2542 = vmatprep.subr.mxu0 0.0
        %2543 = vmatpush2.msra.mxu0 0.0
        %2544 = vmatprep.subr.mxu0 0.0
        %2545 = vmatpush2.msra.mxu0 0.0
        %2546 = vmatprep.subr.mxu0 0.0
        %2547 = vmatpush2.msra.mxu0 0.0
        %2548 = vmatprep.subr.mxu0 0.0
        %2549 = vmatpush2.msra.mxu0 0.0
        %2550 = vmatprep.subr.mxu0 0.0
        %2551 = vmatpush2.msra.mxu0 0.0
        %2552 = vmatprep.subr.mxu0 0.0
        %2553 = vmatpush2.msra.mxu0 0.0
        %2554 = vmatprep.subr.mxu0 0.0
        %2555 = vmatpush2.msra.mxu0 0.0
        %2556 = vmatprep.subr.mxu0 0.0
        %2557 = vmatpush2.msra.mxu0 0.0
        %2558 = vmatprep.subr.mxu0 0.0
        %2559 = vmatpush2.msra.mxu0 0.0
        %2560 = vmatprep.subr.mxu0 0.0
        %2561 = vmatpush2.msra.mxu0 0.0
        %2562 = vmatprep.subr.mxu0 0.0
        %2563 = vmatpush2.msra.mxu0 0.0
        %2564 = vmatprep.subr.mxu0 0.0
        %2565 = vmatpush2.msra.mxu0 0.0
        %2566 = vmatprep.subr.mxu0 0.0
        %2567 = vmatpush2.msra.mxu0 0.0
        %2568 = vmatprep.subr.mxu0 0.0
        %2569 = vmatpush2.msra.mxu0 0.0
        %2570 = vmatprep.subr.mxu0 0.0
        %2571 = vmatpush2.msra.mxu0 0.0
        %2572 = vmatprep.subr.mxu0 0.0
        %2573 = vmatpush2.msra.mxu0 0.0
        %2574 = vmatprep.mubr.f32.mxu0 0.0
        %2575 = vmatmul.mubr.f32.gmra.mxu0 %v1876
        %v2576 = vpop.f32.mrf.mxu0
        %v2577 = vadd.f32 0.0, %v2576
        %v2578 = vpop.f32.mrf.mxu0
        %v2579 = vadd.f32 0.0, %v2578
        %2580 = vmatprep.mubr.f32.mxu0 0.0
        %2581 = vmatmul.mubr.f32.gmra.mxu0 %v1879
        %v2582 = vpop.f32.mrf.mxu0
        %v2583 = vadd.f32 0.0, %v2582
        %v2584 = vpop.f32.mrf.mxu0
        %v2585 = vadd.f32 0.0, %v2584
        %2586 = vmatprep.mubr.f32.mxu0 0.0
        %2587 = vmatmul.mubr.f32.gmra.mxu0 %v1882
        %v2588 = vpop.f32.mrf.mxu0
        %v2589 = vadd.f32 0.0, %v2588
        %v2590 = vpop.f32.mrf.mxu0
        %v2591 = vadd.f32 0.0, %v2590
        %2592 = vmatprep.mubr.f32.mxu0 0.0
        %2593 = vmatmul.mubr.f32.gmra.mxu0 %v1885
        %v2594 = vpop.f32.mrf.mxu0
        %v2595 = vadd.f32 0.0, %v2594
        %v2596 = vpop.f32.mrf.mxu0
        %v2597 = vadd.f32 0.0, %v2596
        %2598 = vdwg.mxu0
        %2599 = vmatprep.subr.mxu0 0.0
        %2600 = vmatpush1.msra.mxu0 0.0
        %2601 = vmatprep.subr.mxu0 0.0
        %2602 = vmatpush1.msra.mxu0 0.0
        %2603 = vmatprep.subr.mxu0 0.0
        %2604 = vmatpush1.msra.mxu0 0.0
        %2605 = vmatprep.subr.mxu0 0.0
        %2606 = vmatpush1.msra.mxu0 0.0
        %2607 = vmatprep.subr.mxu0 0.0
        %2608 = vmatpush1.msra.mxu0 0.0
        %2609 = vmatprep.subr.mxu0 0.0
        %2610 = vmatpush1.msra.mxu0 0.0
        %2611 = vmatprep.subr.mxu0 0.0
        %2612 = vmatpush1.msra.mxu0 0.0
        %2613 = vmatprep.subr.mxu0 0.0
        %2614 = vmatpush1.msra.mxu0 0.0
        %2615 = vmatprep.subr.mxu0 0.0
        %2616 = vmatpush1.msra.mxu0 0.0
        %2617 = vmatprep.subr.mxu0 0.0
        %2618 = vmatpush1.msra.mxu0 0.0
        %2619 = vmatprep.subr.mxu0 0.0
        %2620 = vmatpush1.msra.mxu0 0.0
        %2621 = vmatprep.subr.mxu0 0.0
        %2622 = vmatpush1.msra.mxu0 0.0
        %2623 = vmatprep.subr.mxu0 %v1871
        %2624 = vmatpush1.msra.mxu0 %v1870
        %2625 = vmatprep.subr.mxu0 %v1851
        %2626 = vmatpush1.msra.mxu0 %v1850
        %2627 = vmatprep.subr.mxu0 %v1831
        %2628 = vmatpush1.msra.mxu0 %v1830
        %2629 = vmatprep.subr.mxu0 %v1811
        %2630 = vmatpush1.msra.mxu0 %v1810
        %2631 = vmatprep.subr.mxu0 0.0
        %2632 = vmatpush2.msra.mxu0 0.0
        %2633 = vmatprep.subr.mxu0 0.0
        %2634 = vmatpush2.msra.mxu0 0.0
        %2635 = vmatprep.subr.mxu0 0.0
        %2636 = vmatpush2.msra.mxu0 0.0
        %2637 = vmatprep.subr.mxu0 0.0
        %2638 = vmatpush2.msra.mxu0 0.0
        %2639 = vmatprep.subr.mxu0 0.0
        %2640 = vmatpush2.msra.mxu0 0.0
        %2641 = vmatprep.subr.mxu0 0.0
        %2642 = vmatpush2.msra.mxu0 0.0
        %2643 = vmatprep.subr.mxu0 0.0
        %2644 = vmatpush2.msra.mxu0 0.0
        %2645 = vmatprep.subr.mxu0 0.0
        %2646 = vmatpush2.msra.mxu0 0.0
        %2647 = vmatprep.subr.mxu0 0.0
        %2648 = vmatpush2.msra.mxu0 0.0
        %2649 = vmatprep.subr.mxu0 0.0
        %2650 = vmatpush2.msra.mxu0 0.0
        %2651 = vmatprep.subr.mxu0 0.0
        %2652 = vmatpush2.msra.mxu0 0.0
        %2653 = vmatprep.subr.mxu0 0.0
        %2654 = vmatpush2.msra.mxu0 0.0
        %2655 = vmatprep.subr.mxu0 0.0
        %2656 = vmatpush2.msra.mxu0 0.0
        %2657 = vmatprep.subr.mxu0 0.0
        %2658 = vmatpush2.msra.mxu0 0.0
        %2659 = vmatprep.subr.mxu0 0.0
        %2660 = vmatpush2.msra.mxu0 0.0
        %2661 = vmatprep.subr.mxu0 0.0
        %2662 = vmatpush2.msra.mxu0 0.0
        %2663 = vmatprep.mubr.f32.mxu0 0.0
        %2664 = vmatmul.mubr.f32.gmra.mxu0 %v1876
        %v2665 = vpop.f32.mrf.mxu0
        %v2666 = vadd.f32 0.0, %v2665
        %v2667 = vpop.f32.mrf.mxu0
        %v2668 = vadd.f32 0.0, %v2667
        %2669 = vmatprep.mubr.f32.mxu0 0.0
        %2670 = vmatmul.mubr.f32.gmra.mxu0 %v1879
        %v2671 = vpop.f32.mrf.mxu0
        %v2672 = vadd.f32 0.0, %v2671
        %v2673 = vpop.f32.mrf.mxu0
        %v2674 = vadd.f32 0.0, %v2673
        %2675 = vmatprep.mubr.f32.mxu0 0.0
        %2676 = vmatmul.mubr.f32.gmra.mxu0 %v1882
        %v2677 = vpop.f32.mrf.mxu0
        %v2678 = vadd.f32 0.0, %v2677
        %v2679 = vpop.f32.mrf.mxu0
        %v2680 = vadd.f32 0.0, %v2679
        %2681 = vmatprep.mubr.f32.mxu0 0.0
        %2682 = vmatmul.mubr.f32.gmra.mxu0 %v1885
        %v2683 = vpop.f32.mrf.mxu0
        %v2684 = vadd.f32 0.0, %v2683
        %v2685 = vpop.f32.mrf.mxu0
        %v2686 = vadd.f32 0.0, %v2685
        %2687 = vdwg.mxu0
        %2688 = vmatprep.subr.mxu0 0.0
        %2689 = vmatpush1.msra.mxu0 0.0
        %2690 = vmatprep.subr.mxu0 0.0
        %2691 = vmatpush1.msra.mxu0 0.0
        %2692 = vmatprep.subr.mxu0 0.0
        %2693 = vmatpush1.msra.mxu0 0.0
        %2694 = vmatprep.subr.mxu0 0.0
        %2695 = vmatpush1.msra.mxu0 0.0
        %2696 = vmatprep.subr.mxu0 0.0
        %2697 = vmatpush1.msra.mxu0 0.0
        %2698 = vmatprep.subr.mxu0 0.0
        %2699 = vmatpush1.msra.mxu0 0.0
        %2700 = vmatprep.subr.mxu0 0.0
        %2701 = vmatpush1.msra.mxu0 0.0
        %2702 = vmatprep.subr.mxu0 0.0
        %2703 = vmatpush1.msra.mxu0 0.0
        %2704 = vmatprep.subr.mxu0 0.0
        %2705 = vmatpush1.msra.mxu0 0.0
        %2706 = vmatprep.subr.mxu0 0.0
        %2707 = vmatpush1.msra.mxu0 0.0
        %2708 = vmatprep.subr.mxu0 0.0
        %2709 = vmatpush1.msra.mxu0 0.0
        %2710 = vmatprep.subr.mxu0 0.0
        %2711 = vmatpush1.msra.mxu0 0.0
        %2712 = vmatprep.subr.mxu0 %v1873
        %2713 = vmatpush1.msra.mxu0 %v1872
        %2714 = vmatprep.subr.mxu0 %v1853
        %2715 = vmatpush1.msra.mxu0 %v1852
        %2716 = vmatprep.subr.mxu0 %v1833
        %2717 = vmatpush1.msra.mxu0 %v1832
        %2718 = vmatprep.subr.mxu0 %v1813
        %2719 = vmatpush1.msra.mxu0 %v1812
        %2720 = vmatprep.subr.mxu0 0.0
        %2721 = vmatpush2.msra.mxu0 0.0
        %2722 = vmatprep.subr.mxu0 0.0
        %2723 = vmatpush2.msra.mxu0 0.0
        %2724 = vmatprep.subr.mxu0 0.0
        %2725 = vmatpush2.msra.mxu0 0.0
        %2726 = vmatprep.subr.mxu0 0.0
        %2727 = vmatpush2.msra.mxu0 0.0
        %2728 = vmatprep.subr.mxu0 0.0
        %2729 = vmatpush2.msra.mxu0 0.0
        %2730 = vmatprep.subr.mxu0 0.0
        %2731 = vmatpush2.msra.mxu0 0.0
        %2732 = vmatprep.subr.mxu0 0.0
        %2733 = vmatpush2.msra.mxu0 0.0
        %2734 = vmatprep.subr.mxu0 0.0
        %2735 = vmatpush2.msra.mxu0 0.0
        %2736 = vmatprep.subr.mxu0 0.0
        %2737 = vmatpush2.msra.mxu0 0.0
        %2738 = vmatprep.subr.mxu0 0.0
        %2739 = vmatpush2.msra.mxu0 0.0
        %2740 = vmatprep.subr.mxu0 0.0
        %2741 = vmatpush2.msra.mxu0 0.0
        %2742 = vmatprep.subr.mxu0 0.0
        %2743 = vmatpush2.msra.mxu0 0.0
        %2744 = vmatprep.subr.mxu0 0.0
        %2745 = vmatpush2.msra.mxu0 0.0
        %2746 = vmatprep.subr.mxu0 0.0
        %2747 = vmatpush2.msra.mxu0 0.0
        %2748 = vmatprep.subr.mxu0 0.0
        %2749 = vmatpush2.msra.mxu0 0.0
        %2750 = vmatprep.subr.mxu0 0.0
        %2751 = vmatpush2.msra.mxu0 0.0
        %2752 = vmatprep.mubr.f32.mxu0 0.0
        %2753 = vmatmul.mubr.f32.gmra.mxu0 %v1876
        %v2754 = vpop.f32.mrf.mxu0
        %v2755 = vadd.f32 0.0, %v2754
        %v2756 = vpop.f32.mrf.mxu0
        %v2757 = vadd.f32 0.0, %v2756
        %2758 = vmatprep.mubr.f32.mxu0 0.0
        %2759 = vmatmul.mubr.f32.gmra.mxu0 %v1879
        %v2760 = vpop.f32.mrf.mxu0
        %v2761 = vadd.f32 0.0, %v2760
        %v2762 = vpop.f32.mrf.mxu0
        %v2763 = vadd.f32 0.0, %v2762
        %2764 = vmatprep.mubr.f32.mxu0 0.0
        %2765 = vmatmul.mubr.f32.gmra.mxu0 %v1882
        %v2766 = vpop.f32.mrf.mxu0
        %v2767 = vadd.f32 0.0, %v2766
        %v2768 = vpop.f32.mrf.mxu0
        %v2769 = vadd.f32 0.0, %v2768
        %2770 = vmatprep.mubr.f32.mxu0 0.0
        %2771 = vmatmul.mubr.f32.gmra.mxu0 %v1885
        %v2772 = vpop.f32.mrf.mxu0
        %v2773 = vadd.f32 0.0, %v2772
        %v2774 = vpop.f32.mrf.mxu0
        %v2775 = vadd.f32 0.0, %v2774
        %2776 = vdwg.mxu0
        %v2777 = vmul.f32 %v1025, %v1954
        %v2778 = vmul.f32 %v1026, %v1956
        %v2779 = vmul.f32 %v1027, %v2043
        %v2780 = vmul.f32 %v1028, %v2045
        %v2781 = vmul.f32 %v1029, %v2132
        %v2782 = vmul.f32 %v1030, %v2134
        %v2783 = vmul.f32 %v1031, %v2221
        %v2784 = vmul.f32 %v1032, %v2223
        %v2785 = vmul.f32 %v1033, %v2310
        %v2786 = vmul.f32 %v1034, %v2312
        %v2787 = vmul.f32 %v1035, %v2399
        %v2788 = vmul.f32 %v1036, %v2401
        %v2789 = vmul.f32 %v1037, %v2488
        %v2790 = vmul.f32 %v1038, %v2490
        %v2791 = vmul.f32 %v1039, %v2577
        %v2792 = vmul.f32 %v1040, %v2579
        %v2793 = vmul.f32 %v1041, %v2666
        %v2794 = vmul.f32 %v1042, %v2668
        %v2795 = vmul.f32 %v1043, %v2755
        %v2796 = vmul.f32 %v1044, %v2757
        %v2797 = vmul.f32 %v1045, %v1960
        %v2798 = vmul.f32 %v1046, %v1962
        %v2799 = vmul.f32 %v1047, %v2049
        %v2800 = vmul.f32 %v1048, %v2051
        %v2801 = vmul.f32 %v1049, %v2138
        %v2802 = vmul.f32 %v1050, %v2140
        %v2803 = vmul.f32 %v1051, %v2227
        %v2804 = vmul.f32 %v1052, %v2229
        %v2805 = vmul.f32 %v1053, %v2316
        %v2806 = vmul.f32 %v1054, %v2318
        %v2807 = vmul.f32 %v1055, %v2405
        %v2808 = vmul.f32 %v1056, %v2407
        %v2809 = vmul.f32 %v1057, %v2494
        %v2810 = vmul.f32 %v1058, %v2496
        %v2811 = vmul.f32 %v1059, %v2583
        %v2812 = vmul.f32 %v1060, %v2585
        %v2813 = vmul.f32 %v1061, %v2672
        %v2814 = vmul.f32 %v1062, %v2674
        %v2815 = vmul.f32 %v1063, %v2761
        %v2816 = vmul.f32 %v1064, %v2763
        %v2817 = vmul.f32 %v1065, %v1966
        %v2818 = vmul.f32 %v1066, %v1968
        %v2819 = vmul.f32 %v1067, %v2055
        %v2820 = vmul.f32 %v1068, %v2057
        %v2821 = vmul.f32 %v1069, %v2144
        %v2822 = vmul.f32 %v1070, %v2146
        %v2823 = vmul.f32 %v1071, %v2233
        %v2824 = vmul.f32 %v1072, %v2235
        %v2825 = vmul.f32 %v1073, %v2322
        %v2826 = vmul.f32 %v1074, %v2324
        %v2827 = vmul.f32 %v1075, %v2411
        %v2828 = vmul.f32 %v1076, %v2413
        %v2829 = vmul.f32 %v1077, %v2500
        %v2830 = vmul.f32 %v1078, %v2502
        %v2831 = vmul.f32 %v1079, %v2589
        %v2832 = vmul.f32 %v1080, %v2591
        %v2833 = vmul.f32 %v1081, %v2678
        %v2834 = vmul.f32 %v1082, %v2680
        %v2835 = vmul.f32 %v1083, %v2767
        %v2836 = vmul.f32 %v1084, %v2769
        %v2837 = vmul.f32 %v1085, %v1972
        %v2838 = vmul.f32 %v1086, %v1974
        %v2839 = vmul.f32 %v1087, %v2061
        %v2840 = vmul.f32 %v1088, %v2063
        %v2841 = vmul.f32 %v1089, %v2150
        %v2842 = vmul.f32 %v1090, %v2152
        %v2843 = vmul.f32 %v1091, %v2239
        %v2844 = vmul.f32 %v1092, %v2241
        %v2845 = vmul.f32 %v1093, %v2328
        %v2846 = vmul.f32 %v1094, %v2330
        %v2847 = vmul.f32 %v1095, %v2417
        %v2848 = vmul.f32 %v1096, %v2419
        %v2849 = vmul.f32 %v1097, %v2506
        %v2850 = vmul.f32 %v1098, %v2508
        %v2851 = vmul.f32 %v1099, %v2595
        %v2852 = vmul.f32 %v1100, %v2597
        %v2853 = vmul.f32 %v1101, %v2684
        %v2854 = vmul.f32 %v1102, %v2686
        %v2855 = vmul.f32 %v1103, %v2773
        %v2856 = vmul.f32 %v1104, %v2775
        %v2857 = vadd.f32 %v2777, %v2797
        %v2858 = vadd.f32 %v2857, %v2817
        %v2859 = vadd.f32 %v2858, %v2837
        %v2860 = vrot.slane %v2859, 4
        %v2861 = vadd.f32 %v2859, %v2860
        %v2862 = vrot.slane %v2861, 2
        %v2863 = vadd.f32 %v2861, %v2862
        %v2864 = vrot.slane %v2863, 1
        %v2865 = vadd.f32 %v2863, %v2864
        %v2866 = vadd.f32 %v2778, %v2798
        %v2867 = vadd.f32 %v2866, %v2818
        %v2868 = vadd.f32 %v2867, %v2838
        %v2869 = vrot.slane %v2868, 4
        %v2870 = vadd.f32 %v2868, %v2869
        %v2871 = vrot.slane %v2870, 2
        %v2872 = vadd.f32 %v2870, %v2871
        %v2873 = vrot.slane %v2872, 1
        %v2874 = vadd.f32 %v2872, %v2873
        %v2875 = vadd.f32 %v2779, %v2799
        %v2876 = vadd.f32 %v2875, %v2819
        %v2877 = vadd.f32 %v2876, %v2839
        %v2878 = vrot.slane %v2877, 4
        %v2879 = vadd.f32 %v2877, %v2878
        %v2880 = vrot.slane %v2879, 2
        %v2881 = vadd.f32 %v2879, %v2880
        %v2882 = vrot.slane %v2881, 1
        %v2883 = vadd.f32 %v2881, %v2882
        %v2884 = vadd.f32 %v2780, %v2800
        %v2885 = vadd.f32 %v2884, %v2820
        %v2886 = vadd.f32 %v2885, %v2840
        %v2887 = vrot.slane %v2886, 4
        %v2888 = vadd.f32 %v2886, %v2887
        %v2889 = vrot.slane %v2888, 2
        %v2890 = vadd.f32 %v2888, %v2889
        %v2891 = vrot.slane %v2890, 1
        %v2892 = vadd.f32 %v2890, %v2891
        %v2893 = vadd.f32 %v2781, %v2801
        %v2894 = vadd.f32 %v2893, %v2821
        %v2895 = vadd.f32 %v2894, %v2841
        %v2896 = vrot.slane %v2895, 4
        %v2897 = vadd.f32 %v2895, %v2896
        %v2898 = vrot.slane %v2897, 2
        %v2899 = vadd.f32 %v2897, %v2898
        %v2900 = vrot.slane %v2899, 1
        %v2901 = vadd.f32 %v2899, %v2900
        %v2902 = vadd.f32 %v2782, %v2802
        %v2903 = vadd.f32 %v2902, %v2822
        %v2904 = vadd.f32 %v2903, %v2842
        %v2905 = vrot.slane %v2904, 4
        %v2906 = vadd.f32 %v2904, %v2905
        %v2907 = vrot.slane %v2906, 2
        %v2908 = vadd.f32 %v2906, %v2907
        %v2909 = vrot.slane %v2908, 1
        %v2910 = vadd.f32 %v2908, %v2909
        %v2911 = vadd.f32 %v2783, %v2803
        %v2912 = vadd.f32 %v2911, %v2823
        %v2913 = vadd.f32 %v2912, %v2843
        %v2914 = vrot.slane %v2913, 4
        %v2915 = vadd.f32 %v2913, %v2914
        %v2916 = vrot.slane %v2915, 2
        %v2917 = vadd.f32 %v2915, %v2916
        %v2918 = vrot.slane %v2917, 1
        %v2919 = vadd.f32 %v2917, %v2918
        %v2920 = vadd.f32 %v2784, %v2804
        %v2921 = vadd.f32 %v2920, %v2824
        %v2922 = vadd.f32 %v2921, %v2844
        %v2923 = vrot.slane %v2922, 4
        %v2924 = vadd.f32 %v2922, %v2923
        %v2925 = vrot.slane %v2924, 2
        %v2926 = vadd.f32 %v2924, %v2925
        %v2927 = vrot.slane %v2926, 1
        %v2928 = vadd.f32 %v2926, %v2927
        %v2929 = vadd.f32 %v2785, %v2805
        %v2930 = vadd.f32 %v2929, %v2825
        %v2931 = vadd.f32 %v2930, %v2845
        %v2932 = vrot.slane %v2931, 4
        %v2933 = vadd.f32 %v2931, %v2932
        %v2934 = vrot.slane %v2933, 2
        %v2935 = vadd.f32 %v2933, %v2934
        %v2936 = vrot.slane %v2935, 1
        %v2937 = vadd.f32 %v2935, %v2936
        %v2938 = vadd.f32 %v2786, %v2806
        %v2939 = vadd.f32 %v2938, %v2826
        %v2940 = vadd.f32 %v2939, %v2846
        %v2941 = vrot.slane %v2940, 4
        %v2942 = vadd.f32 %v2940, %v2941
        %v2943 = vrot.slane %v2942, 2
        %v2944 = vadd.f32 %v2942, %v2943
        %v2945 = vrot.slane %v2944, 1
        %v2946 = vadd.f32 %v2944, %v2945
        %v2947 = vadd.f32 %v2787, %v2807
        %v2948 = vadd.f32 %v2947, %v2827
        %v2949 = vadd.f32 %v2948, %v2847
        %v2950 = vrot.slane %v2949, 4
        %v2951 = vadd.f32 %v2949, %v2950
        %v2952 = vrot.slane %v2951, 2
        %v2953 = vadd.f32 %v2951, %v2952
        %v2954 = vrot.slane %v2953, 1
        %v2955 = vadd.f32 %v2953, %v2954
        %v2956 = vadd.f32 %v2788, %v2808
        %v2957 = vadd.f32 %v2956, %v2828
        %v2958 = vadd.f32 %v2957, %v2848
        %v2959 = vrot.slane %v2958, 4
        %v2960 = vadd.f32 %v2958, %v2959
        %v2961 = vrot.slane %v2960, 2
        %v2962 = vadd.f32 %v2960, %v2961
        %v2963 = vrot.slane %v2962, 1
        %v2964 = vadd.f32 %v2962, %v2963
        %v2965 = vadd.f32 %v2789, %v2809
        %v2966 = vadd.f32 %v2965, %v2829
        %v2967 = vadd.f32 %v2966, %v2849
        %v2968 = vrot.slane %v2967, 4
        %v2969 = vadd.f32 %v2967, %v2968
        %v2970 = vrot.slane %v2969, 2
        %v2971 = vadd.f32 %v2969, %v2970
        %v2972 = vrot.slane %v2971, 1
        %v2973 = vadd.f32 %v2971, %v2972
        %v2974 = vadd.f32 %v2790, %v2810
        %v2975 = vadd.f32 %v2974, %v2830
        %v2976 = vadd.f32 %v2975, %v2850
        %v2977 = vrot.slane %v2976, 4
        %v2978 = vadd.f32 %v2976, %v2977
        %v2979 = vrot.slane %v2978, 2
        %v2980 = vadd.f32 %v2978, %v2979
        %v2981 = vrot.slane %v2980, 1
        %v2982 = vadd.f32 %v2980, %v2981
        %v2983 = vadd.f32 %v2791, %v2811
        %v2984 = vadd.f32 %v2983, %v2831
        %v2985 = vadd.f32 %v2984, %v2851
        %v2986 = vrot.slane %v2985, 4
        %v2987 = vadd.f32 %v2985, %v2986
        %v2988 = vrot.slane %v2987, 2
        %v2989 = vadd.f32 %v2987, %v2988
        %v2990 = vrot.slane %v2989, 1
        %v2991 = vadd.f32 %v2989, %v2990
        %v2992 = vadd.f32 %v2792, %v2812
        %v2993 = vadd.f32 %v2992, %v2832
        %v2994 = vadd.f32 %v2993, %v2852
        %v2995 = vrot.slane %v2994, 4
        %v2996 = vadd.f32 %v2994, %v2995
        %v2997 = vrot.slane %v2996, 2
        %v2998 = vadd.f32 %v2996, %v2997
        %v2999 = vrot.slane %v2998, 1
        %v3000 = vadd.f32 %v2998, %v2999
        %v3001 = vadd.f32 %v2793, %v2813
        %v3002 = vadd.f32 %v3001, %v2833
        %v3003 = vadd.f32 %v3002, %v2853
        %v3004 = vrot.slane %v3003, 4
        %v3005 = vadd.f32 %v3003, %v3004
        %v3006 = vrot.slane %v3005, 2
        %v3007 = vadd.f32 %v3005, %v3006
        %v3008 = vrot.slane %v3007, 1
        %v3009 = vadd.f32 %v3007, %v3008
        %v3010 = vadd.f32 %v2794, %v2814
        %v3011 = vadd.f32 %v3010, %v2834
        %v3012 = vadd.f32 %v3011, %v2854
        %v3013 = vrot.slane %v3012, 4
        %v3014 = vadd.f32 %v3012, %v3013
        %v3015 = vrot.slane %v3014, 2
        %v3016 = vadd.f32 %v3014, %v3015
        %v3017 = vrot.slane %v3016, 1
        %v3018 = vadd.f32 %v3016, %v3017
        %v3019 = vadd.f32 %v2795, %v2815
        %v3020 = vadd.f32 %v3019, %v2835
        %v3021 = vadd.f32 %v3020, %v2855
        %v3022 = vrot.slane %v3021, 4
        %v3023 = vadd.f32 %v3021, %v3022
        %v3024 = vrot.slane %v3023, 2
        %v3025 = vadd.f32 %v3023, %v3024
        %v3026 = vrot.slane %v3025, 1
        %v3027 = vadd.f32 %v3025, %v3026
        %v3028 = vadd.f32 %v2796, %v2816
        %v3029 = vadd.f32 %v3028, %v2836
        %v3030 = vadd.f32 %v3029, %v2856
        %v3031 = vrot.slane %v3030, 4
        %v3032 = vadd.f32 %v3030, %v3031
        %v3033 = vrot.slane %v3032, 2
        %v3034 = vadd.f32 %v3032, %v3033
        %v3035 = vrot.slane %v3034, 1
        %v3036 = vadd.f32 %v3034, %v3035
        %v3057 = vcombine.low %v2865, %v2874
        %v3058 = vcombine.low %v2883, %v2892
        %v3059 = vcombine.low %v2901, %v2910
        %v3060 = vcombine.low %v2919, %v2928
        %v3062 = vunpack.c.l.s4 1966171168
        %v3063 = vunpack.c.0.s8 %v3062
        %v3064 = vlaneseq
        %v3065 = vshrl.u32 %v3064, 7
        %v3066 = vsub.s32 %v3063, %v3065
        %v3067 = vrot.slane %v3057, %v3066
        %v3069 = vunpack.c.l.s4 1966171168
        %v3070 = vunpack.c.0.s8 %v3069
        %v3071 = vlaneseq
        %v3072 = vshrl.u32 %v3071, 7
        %v3073 = vsub.s32 %v3070, %v3072
        %v3074 = vrot.slane %v3058, %v3073
        %v3076 = vunpack.c.l.s4 1966171168
        %v3077 = vunpack.c.0.s8 %v3076
        %v3078 = vlaneseq
        %v3079 = vshrl.u32 %v3078, 7
        %v3080 = vsub.s32 %v3077, %v3079
        %v3081 = vrot.slane %v3059, %v3080
        %v3083 = vunpack.c.l.s4 1966171168
        %v3084 = vunpack.c.0.s8 %v3083
        %v3085 = vlaneseq
        %v3086 = vshrl.u32 %v3085, 7
        %v3087 = vsub.s32 %v3084, %v3086
        %v3088 = vrot.slane %v3060, %v3087
        %v3089 = vcombine.low %v3067, %v3074
        %v3090 = vcombine.low %v3081, %v3088
        %v3092 = vunpack.c.l.s4 1966171168
        %v3093 = vunpack.c.0.s8 %v3092
        %v3094 = vlaneseq
        %v3095 = vshrl.u32 %v3094, 7
        %v3096 = vsub.s32 %v3093, %v3095
        %v3097 = vrot.slane %v3089, %v3096
        %v3099 = vunpack.c.l.s4 1966171168
        %v3100 = vunpack.c.0.s8 %v3099
        %v3101 = vlaneseq
        %v3102 = vshrl.u32 %v3101, 7
        %v3103 = vsub.s32 %v3100, %v3102
        %v3104 = vrot.slane %v3090, %v3103
        %v3105 = vcombine.low %v3097, %v3104
        %v3106 = vcombine.low %v2937, %v2946
        %v3107 = vcombine.low %v2955, %v2964
        %v3108 = vcombine.low %v2973, %v2982
        %v3109 = vcombine.low %v2991, %v3000
        %v3111 = vunpack.c.l.s4 1966171168
        %v3112 = vunpack.c.0.s8 %v3111
        %v3113 = vlaneseq
        %v3114 = vshrl.u32 %v3113, 7
        %v3115 = vsub.s32 %v3112, %v3114
        %v3116 = vrot.slane %v3106, %v3115
        %v3118 = vunpack.c.l.s4 1966171168
        %v3119 = vunpack.c.0.s8 %v3118
        %v3120 = vlaneseq
        %v3121 = vshrl.u32 %v3120, 7
        %v3122 = vsub.s32 %v3119, %v3121
        %v3123 = vrot.slane %v3107, %v3122
        %v3125 = vunpack.c.l.s4 1966171168
        %v3126 = vunpack.c.0.s8 %v3125
        %v3127 = vlaneseq
        %v3128 = vshrl.u32 %v3127, 7
        %v3129 = vsub.s32 %v3126, %v3128
        %v3130 = vrot.slane %v3108, %v3129
        %v3132 = vunpack.c.l.s4 1966171168
        %v3133 = vunpack.c.0.s8 %v3132
        %v3134 = vlaneseq
        %v3135 = vshrl.u32 %v3134, 7
        %v3136 = vsub.s32 %v3133, %v3135
        %v3137 = vrot.slane %v3109, %v3136
        %v3138 = vcombine.low %v3116, %v3123
        %v3139 = vcombine.low %v3130, %v3137
        %v3141 = vunpack.c.l.s4 1966171168
        %v3142 = vunpack.c.0.s8 %v3141
        %v3143 = vlaneseq
        %v3144 = vshrl.u32 %v3143, 7
        %v3145 = vsub.s32 %v3142, %v3144
        %v3146 = vrot.slane %v3138, %v3145
        %v3148 = vunpack.c.l.s4 1966171168
        %v3149 = vunpack.c.0.s8 %v3148
        %v3150 = vlaneseq
        %v3151 = vshrl.u32 %v3150, 7
        %v3152 = vsub.s32 %v3149, %v3151
        %v3153 = vrot.slane %v3139, %v3152
        %v3154 = vcombine.low %v3146, %v3153
        %v3155 = vcombine.low %v3009, %v3018
        %v3156 = vcombine.low %v3027, %v3036
        %v3158 = vunpack.c.l.s4 1966171168
        %v3159 = vunpack.c.0.s8 %v3158
        %v3160 = vlaneseq
        %v3161 = vshrl.u32 %v3160, 7
        %v3162 = vsub.s32 %v3159, %v3161
        %v3163 = vrot.slane %v3155, %v3162
        %v3165 = vunpack.c.l.s4 1966171168
        %v3166 = vunpack.c.0.s8 %v3165
        %v3167 = vlaneseq
        %v3168 = vshrl.u32 %v3167, 7
        %v3169 = vsub.s32 %v3166, %v3168
        %v3170 = vrot.slane %v3156, %v3169
        %v3171 = vcombine.low %v3163, %v3170
        %v3173 = vunpack.c.l.s4 1966171168
        %v3174 = vunpack.c.0.s8 %v3173
        %v3175 = vlaneseq
        %v3176 = vshrl.u32 %v3175, 7
        %v3177 = vsub.s32 %v3174, %v3176
        %v3178 = vrot.slane %v3171, %v3177
        %3182 = vst [vmem:[%s236] sm:$0xff] %v3105
        %3183 = vst [vmem:[%s236 + $0x8] sm:$0xff] %v3154
        %v3184 = vlaneseq
        %vm3185 = vcmp.ge.s32.totalorder %v3184, 0
        %vm3186 = vcmp.lt.s32.totalorder %v3184, 512
        %vm3187 = vmand %vm3185, %vm3186
        %3188 = vst.msk [vmem:[%s236 + $0x10] sm:$0xf] %vm3187, %v3178
        %s3189 = sand.u32 %s102, 1
        %s3190 = scalar_lea.sflag [#allocation4], %s3189
        %s3191 = sand.u32 %s102, 1
        %s3192 = smul.addr %s3191, 20
        %s3193 = scalar_lea.vmem [#allocation8], %s3192
        // Predicated region
        $region45: #{tpu_custom_call.1} parent=31 // pred_check
          %p3194 = pneg %p112
        $region46: #{tpu_custom_call.1} parent=31 // pred_check_branch
          %3196 = sbr.rel (%p3194) target = $region48
        $region47: #{tpu_custom_call.1} parent=31 // pred_region
          %s3197 = smul.u32 20, %s21
          %s3199 = ssub.s32 320, 320
          %3200 = vsyncadd %s3190, %s3199
          %s3201 = smul.addr %s3197, 16
          %s3202 = scalar_lea.hbm %s3, %s3201
          %s3204 = sshll.u32 %s3193, 4
          %s3205 = int_to_ptr.vmem [resolvable:$true] %s3204
          %3207 = dma.vmem_to_hbm [thread:$0]  %s3205, 320, %s3202, %s3190
        $region48: #{tpu_custom_call.1} parent=31 // pred_fallthru
          _
      $region32: #{tpu_custom_call.1} parent=5 // pred_fallthru
        _
      %p3208 = scmp.le.s32.totalorder 2, %s16
      // Predicated region
      $region49: #{tpu_custom_call.1} parent=5 // pred_check
        %p3209 = pneg %p3208
      $region50: #{tpu_custom_call.1} parent=5 // pred_check_branch
        %3211 = sbr.rel (%p3209) target = $region52
      $region51: #{tpu_custom_call.1} parent=5 // pred_region
        %s3212 = ssub.s32 %s16, 2
        // Predicated region
        $region53: #{tpu_custom_call.1} parent=51 // pred_check
          %p3213 = pneg %p118
        $region54: #{tpu_custom_call.1} parent=51 // pred_check_branch
          %3215 = sbr.rel (%p3213) target = $region56
        $region55: #{tpu_custom_call.1} parent=51 // pred_region
          %s3216 = sand.u32 %s103, 1
          %s3217 = scalar_lea.sflag [#allocation4], %s3216
          %s3218 = sand.u32 %s103, 1
          %s3219 = smul.addr %s3218, 20
          %s3220 = scalar_lea.vmem [#allocation8], %s3219
          %3221 = dma.done %s3217, 320
        $region56: #{tpu_custom_call.1} parent=51 // pred_fallthru
          _
      $region52: #{tpu_custom_call.1} parent=5 // pred_fallthru
        _
    $region6: #{tpu_custom_call.1} parent=1 // loop_footer
      %s20 = sadd.s32 1, %s16
    $region7: #{tpu_custom_call.1} parent=1 // loop_footer_branch
      %15 = sbr.rel target = $region3
    $region8: #{tpu_custom_call.1} parent=1 // loop_exit
      _
    %3222 = vsyncpa [#allocation3], 1
    %s3223 = scalar_lea.sflag [#allocation3], 1
    %3224 = vsyncpa %s3223, 1
    %3225 = vsyncpa [#allocation6], 1
    %s3226 = scalar_lea.sflag [#allocation6], 1
    %3227 = vsyncpa %s3226, 1
    %3228 = vsyncpa [#allocation4], 1
    %s3229 = scalar_lea.sflag [#allocation4], 1
    %3230 = vsyncpa %s3229, 1

</llo_original>
